<compile_context>
chip_gen: v7x
topology: tpu7x:2x2x1
jax: 0.10.0
libtpu: 0.0.40
codegen_flags: <defaults>
</compile_context>

<pallas_src>
import jax
import jax.numpy as jnp
from jax.experimental import pallas as pl
from jax.experimental.pallas import tpu as pltpu

LANE = 128


def _round_up(v, m):
    return ((v + m - 1) // m) * m


# ----------------------------------------------------------------------------
# Fused kernel: x -> [relu(x@W'+c)]*(L-1) -> x@W+b -> log_softmax
# ----------------------------------------------------------------------------
def _make_fused_mlp_kernel(num_layers, valid_out):
    """Kernel signature: (x_ref, w0, c0, w1, c1, ..., w_{L-1}, c_{L-1}, o_ref)."""

    def kernel(x_ref, *refs):
        o_ref = refs[-1]
        h = x_ref[...]                                         # bf16 (tile, d0_p)

        # Hidden layers: relu(h @ W' + c)  (BN already folded into W', c).
        for li in range(num_layers - 1):
            w = refs[2 * li][...]                              # bf16 (d_in_p, d_out_p)
            c = refs[2 * li + 1][...]                          # f32  (1, d_out_p)
            y = jnp.dot(h, w, preferred_element_type=jnp.float32) + c
            h = jnp.maximum(y, 0.0).astype(jnp.bfloat16)       # back to bf16 for MXU

        # Final layer + log_softmax over the valid (unpadded) lanes only.
        w = refs[2 * (num_layers - 1)][...]
        c = refs[2 * (num_layers - 1) + 1][...]
        logits = jnp.dot(h, w, preferred_element_type=jnp.float32) + c
        lane = jax.lax.broadcasted_iota(jnp.int32, logits.shape, 1)
        logits = jnp.where(lane < valid_out, logits, jnp.float32(-1e30))
        m = jnp.max(logits, axis=-1, keepdims=True)
        lse = m + jnp.log(jnp.sum(jnp.exp(logits - m), axis=-1, keepdims=True))
        o_ref[...] = (logits - lse).astype(o_ref.dtype)

    return kernel


# ----------------------------------------------------------------------------
# Wrapper: fold BN, pad to lane-dense shapes, run one fused pallas_call
# ----------------------------------------------------------------------------
def mlp_forward(params, x, tile_rows=256, bn_eps=1e-5):
    lins, bns = params["lins"], params["bns"]
    num_layers = len(lins)
    n, f_in = x.shape
    valid_out = lins[-1][0].shape[1]

    # ---- fold eval-mode BatchNorm into the linear weights (in f32) ----------
    folded = []
    for li, (w, b) in enumerate(lins):
        if li < num_layers - 1:
            gamma, beta, rmean, rvar = bns[li]
            scale = gamma / jnp.sqrt(rvar + bn_eps)            # (1, d_out)
            shift = beta - rmean * scale
            folded.append((w * scale, b * scale + shift))
        else:
            folded.append((w, b))

    # ---- pad every feature dim to a multiple of 128, weights -> bf16 --------
    flat_args = []
    for (w, c) in folded:
        d_in, d_out = w.shape
        d_in_p, d_out_p = _round_up(d_in, LANE), _round_up(d_out, LANE)
        w_p = jnp.zeros((d_in_p, d_out_p), jnp.float32).at[:d_in, :d_out].set(w)
        c_p = jnp.zeros((1, d_out_p), jnp.float32).at[:, :d_out].set(c)
        flat_args += [w_p.astype(jnp.bfloat16), c_p]
    f_in_p = flat_args[0].shape[0]
    f_out_p = flat_args[-2].shape[1]

    # ---- pad rows to the tile, pad/cast activations to bf16 -----------------
    tile = min(tile_rows, _round_up(n, 8))                     # sublane-aligned
    n_p = _round_up(n, tile)
    x_p = jnp.zeros((n_p, f_in_p), jnp.float32).at[:n, :f_in].set(x)
    x_p = x_p.astype(jnp.bfloat16)

    grid = (n_p // tile,)
    in_specs = [pl.BlockSpec((tile, f_in_p), lambda i: (i, 0))]
    for a in flat_args:                                        # broadcast blocks
        in_specs.append(pl.BlockSpec(a.shape, lambda i: (0, 0)))

    out = pl.pallas_call(
        _make_fused_mlp_kernel(num_layers, valid_out),
        out_shape=jax.ShapeDtypeStruct((n_p, f_out_p), jnp.float32),
        grid_spec=pltpu.PrefetchScalarGridSpec(
            num_scalar_prefetch=0,
            grid=grid,
            in_specs=in_specs,
            out_specs=pl.BlockSpec((tile, f_out_p), lambda i: (i, 0)),
        ),
        compiler_params=pltpu.CompilerParams(
            dimension_semantics=("parallel",),        # row tiles shard over v7x's 2 TCs
            vmem_limit_bytes=48 * 1024 * 1024,        # headroom on v7x's 64 MiB VMEM
        ),
    )(x_p, *flat_args)

    return out[:n, :valid_out]


# ----------------------------------------------------------------------------
# Parameter construction + pure-JAX reference
# ----------------------------------------------------------------------------
def init_mlp_params(key, in_channels, hidden_channels, out_channels, num_layers):
    dims = [in_channels] + [hidden_channels] * (num_layers - 1) + [out_channels]
    params = {"lins": [], "bns": []}
    for li in range(num_layers):
        fan_in, fan_out = dims[li], dims[li + 1]
        key, kw, kb = jax.random.split(key, 3)
        bound = 1.0 / jnp.sqrt(fan_in)
        w = jax.random.uniform(kw, (fan_in, fan_out), jnp.float32, -bound, bound)
        b = jax.random.uniform(kb, (1, fan_out), jnp.float32, -bound, bound)
        params["lins"].append((w, b))
        if li < num_layers - 1:
            key, kg, kbeta, km, kv = jax.random.split(key, 5)
            gamma = 1.0 + 0.1 * jax.random.normal(kg, (1, fan_out), jnp.float32)
            beta = 0.1 * jax.random.normal(kbeta, (1, fan_out), jnp.float32)
            rmean = 0.1 * jax.random.normal(km, (1, fan_out), jnp.float32)
            rvar = jnp.abs(1.0 + 0.1 * jax.random.normal(kv, (1, fan_out),
                                                         jnp.float32))
            params["bns"].append((gamma, beta, rmean, rvar))
    return params


def mlp_forward_ref(params, x, bn_eps=1e-5, matmul_dtype=jnp.float32):
    """Pure-JAX reference. With matmul_dtype=bf16 it mirrors the kernel's
    numerics exactly (BN folded into W before the bf16 cast, f32 accumulate)."""
    lins, bns = params["lins"], params["bns"]
    num_layers = len(lins)
    h = x
    for li, (w, b) in enumerate(lins):
        if li < num_layers - 1:
            gamma, beta, rmean, rvar = bns[li]
            scale = gamma / jnp.sqrt(rvar + bn_eps)
            shift = beta - rmean * scale
            w_f, c_f = w * scale, b * scale + shift
        else:
            w_f, c_f = w, b
        y = jnp.dot(h.astype(matmul_dtype), w_f.astype(matmul_dtype),
                    preferred_element_type=jnp.float32) + c_f
        h = jnp.maximum(y, 0.0) if li < num_layers - 1 else y
    return jax.nn.log_softmax(h, axis=-1)


if __name__ == "__main__":
    key = jax.random.PRNGKey(0)
    key, kx = jax.random.split(key)

    # Small but non-trivial: multiple row tiles, non-128-multiple feature dims.
    N, IN, HID, OUT, NUM_LAYERS = 512, 100, 64, 10, 3
    x = jax.random.normal(kx, (N, IN), jnp.float32)
    params = init_mlp_params(key, IN, HID, OUT, NUM_LAYERS)

    out = jax.block_until_ready(mlp_forward(params, x, tile_rows=256))

    ref_bf16 = mlp_forward_ref(params, x, matmul_dtype=jnp.bfloat16)  # kernel numerics
    ref_f32 = mlp_forward_ref(params, x, matmul_dtype=jnp.float32)    # full-precision ref

    assert out.shape == (N, OUT)
    assert bool(jnp.all(jnp.isfinite(out)))
    assert jnp.allclose(out, ref_bf16, atol=2e-3, rtol=2e-3), \
        float(jnp.max(jnp.abs(out - ref_bf16)))
    assert jnp.allclose(out, ref_f32, atol=8e-2, rtol=0.0), \
        float(jnp.max(jnp.abs(out - ref_f32)))

    print("KERNEL_OK")
</pallas_src>

<mosaic_0001>
module attributes {stable_mosaic.version = 11 : i64} {
  func.func @kernel(%arg0: i32, %arg1: memref<256x128xbf16, #tpu.memory_space<vmem>>, %arg2: memref<128x128xbf16, #tpu.memory_space<vmem>>, %arg3: memref<1x128xf32, #tpu.memory_space<vmem>>, %arg4: memref<128x128xbf16, #tpu.memory_space<vmem>>, %arg5: memref<1x128xf32, #tpu.memory_space<vmem>>, %arg6: memref<128x128xbf16, #tpu.memory_space<vmem>>, %arg7: memref<1x128xf32, #tpu.memory_space<vmem>>, %arg8: memref<256x128xf32, #tpu.memory_space<vmem>>) attributes {dimension_semantics = [#tpu.dimension_semantics<parallel>], iteration_bounds = array<i64: 2>, scalar_prefetch = 0 : i64, scratch_operands = 0 : i64, tpu.core_type = #tpu.core_type<tc>, window_params = [{transform_indices = @transform_0, window_bounds = array<i64: 256, 128>}, {pipeline_mode = #tpu.pipeline_mode<synchronous>, transform_indices = @transform_1, window_bounds = array<i64: 128, 128>}, {pipeline_mode = #tpu.pipeline_mode<synchronous>, transform_indices = @transform_2, window_bounds = array<i64: 1, 128>}, {pipeline_mode = #tpu.pipeline_mode<synchronous>, transform_indices = @transform_3, window_bounds = array<i64: 128, 128>}, {pipeline_mode = #tpu.pipeline_mode<synchronous>, transform_indices = @transform_4, window_bounds = array<i64: 1, 128>}, {pipeline_mode = #tpu.pipeline_mode<synchronous>, transform_indices = @transform_5, window_bounds = array<i64: 128, 128>}, {pipeline_mode = #tpu.pipeline_mode<synchronous>, transform_indices = @transform_6, window_bounds = array<i64: 1, 128>}, {transform_indices = @transform_7, window_bounds = array<i64: 256, 128>}]} {
    %c0 = arith.constant 0 : index
    %c0_0 = arith.constant 0 : index
    %0 = vector.load %arg1[%c0, %c0_0] : memref<256x128xbf16, #tpu.memory_space<vmem>>, vector<256x128xbf16>
    %c0_1 = arith.constant 0 : index
    %c0_2 = arith.constant 0 : index
    %1 = vector.load %arg2[%c0_1, %c0_2] : memref<128x128xbf16, #tpu.memory_space<vmem>>, vector<128x128xbf16>
    %c0_3 = arith.constant 0 : index
    %c0_4 = arith.constant 0 : index
    %2 = vector.load %arg3[%c0_3, %c0_4] : memref<1x128xf32, #tpu.memory_space<vmem>>, vector<1x128xf32>
    %cst = arith.constant dense<0.000000e+00> : vector<256x128xf32>
    %3 = tpu.matmul %0, %1, %cst {dimension_numbers = #tpu.dot_dimension_numbers<[1], [0], [0], [1], [0, 0, 1, 1], [], []>} : vector<256x128xbf16>, vector<128x128xbf16>, vector<256x128xf32> -> vector<256x128xf32>
    %4 = vector.broadcast %2 : vector<1x128xf32> to vector<256x128xf32>
    %5 = arith.addf %3, %4 : vector<256x128xf32>
    %cst_5 = arith.constant 0.000000e+00 : f32
    %6 = vector.broadcast %cst_5 : f32 to vector<256x128xf32>
    %7 = arith.maximumf %5, %6 : vector<256x128xf32>
    %8 = arith.truncf %7 : vector<256x128xf32> to vector<256x128xbf16>
    %c0_6 = arith.constant 0 : index
    %c0_7 = arith.constant 0 : index
    %9 = vector.load %arg4[%c0_6, %c0_7] : memref<128x128xbf16, #tpu.memory_space<vmem>>, vector<128x128xbf16>
    %c0_8 = arith.constant 0 : index
    %c0_9 = arith.constant 0 : index
    %10 = vector.load %arg5[%c0_8, %c0_9] : memref<1x128xf32, #tpu.memory_space<vmem>>, vector<1x128xf32>
    %cst_10 = arith.constant dense<0.000000e+00> : vector<256x128xf32>
    %11 = tpu.matmul %8, %9, %cst_10 {dimension_numbers = #tpu.dot_dimension_numbers<[1], [0], [0], [1], [0, 0, 1, 1], [], []>} : vector<256x128xbf16>, vector<128x128xbf16>, vector<256x128xf32> -> vector<256x128xf32>
    %12 = vector.broadcast %10 : vector<1x128xf32> to vector<256x128xf32>
    %13 = arith.addf %11, %12 : vector<256x128xf32>
    %cst_11 = arith.constant 0.000000e+00 : f32
    %14 = vector.broadcast %cst_11 : f32 to vector<256x128xf32>
    %15 = arith.maximumf %13, %14 : vector<256x128xf32>
    %16 = arith.truncf %15 : vector<256x128xf32> to vector<256x128xbf16>
    %c0_12 = arith.constant 0 : index
    %c0_13 = arith.constant 0 : index
    %17 = vector.load %arg6[%c0_12, %c0_13] : memref<128x128xbf16, #tpu.memory_space<vmem>>, vector<128x128xbf16>
    %c0_14 = arith.constant 0 : index
    %c0_15 = arith.constant 0 : index
    %18 = vector.load %arg7[%c0_14, %c0_15] : memref<1x128xf32, #tpu.memory_space<vmem>>, vector<1x128xf32>
    %cst_16 = arith.constant dense<0.000000e+00> : vector<256x128xf32>
    %19 = tpu.matmul %16, %17, %cst_16 {dimension_numbers = #tpu.dot_dimension_numbers<[1], [0], [0], [1], [0, 0, 1, 1], [], []>} : vector<256x128xbf16>, vector<128x128xbf16>, vector<256x128xf32> -> vector<256x128xf32>
    %20 = vector.broadcast %18 : vector<1x128xf32> to vector<256x128xf32>
    %21 = arith.addf %19, %20 : vector<256x128xf32>
    %22 = tpu.iota {dimensions = array<i32: 1>} : vector<256x128xi32>
    %c10_i32 = arith.constant 10 : i32
    %23 = vector.broadcast %c10_i32 : i32 to vector<256x128xi32>
    %24 = arith.cmpi slt, %22, %23 : vector<256x128xi32>
    %cst_17 = arith.constant -1.000000e+30 : f32
    %25 = vector.broadcast %cst_17 : f32 to vector<256x128xf32>
    %26 = arith.select %24, %21, %25 : vector<256x128xi1>, vector<256x128xf32>
    %cst_18 = arith.constant dense<0xFF800000> : vector<256xf32>
    %27 = vector.multi_reduction <maximumf>, %26, %cst_18 [1] : vector<256x128xf32> to vector<256xf32>
    %28 = vector.shape_cast %27 : vector<256xf32> to vector<256x1xf32>
    %29 = vector.broadcast %28 : vector<256x1xf32> to vector<256x128xf32>
    %30 = arith.subf %26, %29 : vector<256x128xf32>
    %31 = math.exp %30 : vector<256x128xf32>
    %cst_19 = arith.constant dense<0.000000e+00> : vector<256xf32>
    %32 = vector.multi_reduction <add>, %31, %cst_19 [1] : vector<256x128xf32> to vector<256xf32>
    %33 = vector.shape_cast %32 : vector<256xf32> to vector<256x1xf32>
    %34 = math.log %33 : vector<256x1xf32>
    %35 = arith.addf %28, %34 : vector<256x1xf32>
    %36 = vector.broadcast %35 : vector<256x1xf32> to vector<256x128xf32>
    %37 = arith.subf %26, %36 : vector<256x128xf32>
    %c0_20 = arith.constant 0 : index
    %c0_21 = arith.constant 0 : index
    %38 = vector.load %arg8[%c0_20, %c0_21] : memref<256x128xf32, #tpu.memory_space<vmem>>, vector<256x128xf32>
    tpu.vector_store %arg8[%c0_20, %c0_21], %37 {strides = array<i32>} : memref<256x128xf32, #tpu.memory_space<vmem>>, vector<256x128xf32>,
    return
  }
  func.func @transform_0(%arg0: i32) -> (i32, i32) {
    %c0_i32 = arith.constant 0 : i32
    %c0_i32_0 = arith.constant 0 : i32
    return %arg0, %c0_i32 : i32, i32
  }
  func.func @transform_1(%arg0: i32) -> (i32, i32) {
    %c0_i32 = arith.constant 0 : i32
    %c0_i32_0 = arith.constant 0 : i32
    %c0_i32_1 = arith.constant 0 : i32
    return %c0_i32, %c0_i32_0 : i32, i32
  }
  func.func @transform_2(%arg0: i32) -> (i32, i32) {
    %c0_i32 = arith.constant 0 : i32
    %c0_i32_0 = arith.constant 0 : i32
    %c0_i32_1 = arith.constant 0 : i32
    return %c0_i32, %c0_i32_0 : i32, i32
  }
  func.func @transform_3(%arg0: i32) -> (i32, i32) {
    %c0_i32 = arith.constant 0 : i32
    %c0_i32_0 = arith.constant 0 : i32
    %c0_i32_1 = arith.constant 0 : i32
    return %c0_i32, %c0_i32_0 : i32, i32
  }
  func.func @transform_4(%arg0: i32) -> (i32, i32) {
    %c0_i32 = arith.constant 0 : i32
    %c0_i32_0 = arith.constant 0 : i32
    %c0_i32_1 = arith.constant 0 : i32
    return %c0_i32, %c0_i32_0 : i32, i32
  }
  func.func @transform_5(%arg0: i32) -> (i32, i32) {
    %c0_i32 = arith.constant 0 : i32
    %c0_i32_0 = arith.constant 0 : i32
    %c0_i32_1 = arith.constant 0 : i32
    return %c0_i32, %c0_i32_0 : i32, i32
  }
  func.func @transform_6(%arg0: i32) -> (i32, i32) {
    %c0_i32 = arith.constant 0 : i32
    %c0_i32_0 = arith.constant 0 : i32
    %c0_i32_1 = arith.constant 0 : i32
    return %c0_i32, %c0_i32_0 : i32, i32
  }
  func.func @transform_7(%arg0: i32) -> (i32, i32) {
    %c0_i32 = arith.constant 0 : i32
    %c0_i32_0 = arith.constant 0 : i32
    return %arg0, %c0_i32 : i32, i32
  }
}

</mosaic_0001>

<llo_original>
// kernel: tpu_custom_call.1
$region0: #{tpu_custom_call.1}
  #allocation0 [shape = 'u32[]', space=smem, size = 0x4, offset = 0x4, fixed_abs, tag = 'smem constant byte address 0x4 - core index']
  #allocation1 [shape = 'u32[144,128]{1,0:T(1,128)}', space=vmem, size = 0x12000, scoped, tag = 'internal scratch']
  %s0 = inlined_call_operand.hbm [shape: bf16[512,128], index: 0, kind: input, shape index: {}]
  %s1 = inlined_call_operand.hbm [shape: bf16[128,128], index: 1, kind: input, shape index: {}]
  %s2 = inlined_call_operand.vmem [shape: f32[1,128], index: 2, kind: input, shape index: {}]
  %s3 = inlined_call_operand.hbm [shape: bf16[128,128], index: 3, kind: input, shape index: {}]
  %s4 = inlined_call_operand.vmem [shape: f32[1,128], index: 4, kind: input, shape index: {}]
  %s5 = inlined_call_operand.hbm [shape: bf16[128,128], index: 5, kind: input, shape index: {}]
  %s6 = inlined_call_operand.vmem [shape: f32[1,128], index: 6, kind: input, shape index: {}]
  %s7 = inlined_call_operand.hbm [shape: f32[512,128], index: 7, kind: output, shape index: {}]
  %s8 = sld [smem:[#allocation0]]
  $region77: #{tpu_custom_call.1} parent=0
    _
  %s10 = ssub.s32 1, %s8
  %s11 = scalar_select 0, %s10, %s8
  $region1: #{tpu_custom_call.1} parent=0
    #allocation2 [shape = 'u8[131072]{0}', space=vmem, size = 0x20000, scoped, tag = 'input window, operand 0']
    #allocation3 [shape = 's32[2]{0}', space=sflag, size = 0x8, scoped, tag = 'scoped memory for tpu_custom_call.1']
    #allocation4 [shape = 's32[2]{0}', space=sflag, size = 0x8, scoped, tag = 'scoped memory for tpu_custom_call.1']
    #allocation5 [shape = 'u8[32768]{0}', space=vmem, size = 0x8000, scoped, tag = 'input window, operand 1, single buffered']
    #allocation6 [shape = 's32[1]{0}', space=sflag, size = 0x4, scoped, tag = 'scoped memory for tpu_custom_call.1']
    #allocation7 [shape = 'u8[32768]{0}', space=vmem, size = 0x8000, scoped, tag = 'input window, operand 3, single buffered']
    #allocation8 [shape = 'u8[32768]{0}', space=vmem, size = 0x8000, scoped, tag = 'input window, operand 5, single buffered']
    #allocation9 [shape = 's32[1]{0}', space=sflag, size = 0x4, scoped, tag = 'scoped memory for tpu_custom_call.1']
    #allocation10 [shape = 'u8[262144]{0}', space=vmem, size = 0x40000, scoped, tag = 'output window, operand 0']
    %12 = vsyncpa [#allocation3], 0
    %s13 = scalar_lea.sflag [#allocation3], 1
    %14 = vsyncpa %s13, 0
    %15 = vsyncpa [#allocation6], 0
    %16 = vsyncpa [#allocation9], 0
    %17 = vsyncpa [#allocation4], 0
    %s18 = scalar_lea.sflag [#allocation4], 1
    %19 = vsyncpa %s18, 0
    loop: start=0, step=1, limit=4
    $region2: #{tpu_custom_call.1} parent=1 // loop_pre_header
      _
    $region3: #{tpu_custom_call.1} parent=1 // loop_header
      %s21 = sphi 0, %s25
      %p22 = scmp.ge.s32.totalorder %s21, 4
      %s31 = sphi 0, %s33
      %s34 = sphi 0, %s31
      %s35 = sphi 0, %s34
      %s51 = sphi 0, %s35
      %s55 = sphi 0, %s55
      %s57 = sphi 0, %s55
      %s58 = sphi 0, %s57
      %s72 = sphi 0, %s58
      %s76 = sphi 0, %s76
      %s78 = sphi 0, %s76
      %s79 = sphi 0, %s78
      %s93 = sphi 0, %s79
      %s97 = sphi 0, %s97
      %s99 = sphi 0, %s97
      %s100 = sphi 0, %s99
      %s114 = sphi 0, %s100
      %s118 = sphi 0, %s118
      %s120 = sphi 0, %s118
      %s121 = sphi 0, %s120
      %s135 = sphi 0, %s121
      %s139 = sphi 0, %s139
      %s141 = sphi 0, %s139
      %s142 = sphi 0, %s141
      %s156 = sphi 0, %s142
      %s160 = sphi 0, %s160
      %s162 = sphi 0, %s160
      %s163 = sphi 0, %s162
      %s177 = sphi 0, %s163
      %s183 = sphi 0, %s185
      %s186 = sphi 0, %s183
      %s187 = sphi 0, %s186
      %s203 = sphi 0, %s187
    $region4: #{tpu_custom_call.1} parent=1 // loop_header_branch
      %24 = sbr.rel (%p22) target = $region8
    $region5: #{tpu_custom_call.1} parent=1 // loop_body
      %s26 = ssub.s32 %s21, 1
      %s27 = ssub.s32 %s21, 2
      %s28 = sadd.s32 %s21, 1
      %s29 = ssub.s32 %s21, %s28
      %p30 = scmp.eq.s32.totalorder %s29, 0
      %s32 = sadd.s32 %s31, 1
      %s33 = scalar_select %p30, %s31, %s32
      %p36 = pneg %p30
      %p37 = scmp.eq.s32.totalorder %s21, 1
      %p38 = por %p36, %p37
      %p39 = scmp.ne.s32.totalorder %s31, %s34
      %p40 = scmp.eq.s32.totalorder %s21, 0
      %p41 = por %p39, %p40
      %p42 = scmp.ne.s32.totalorder %s31, %s34
      %p43 = scmp.eq.s32.totalorder %s26, 1
      %p44 = por %p42, %p43
      %p45 = scmp.ne.s32.totalorder %s34, %s35
      %p46 = scmp.eq.s32.totalorder %s26, 0
      %p47 = por %p45, %p46
      %p48 = scmp.ne.s32.totalorder %s34, %s35
      %p49 = scmp.eq.s32.totalorder %s27, 1
      %p50 = por %p48, %p49
      %p52 = scmp.ne.s32.totalorder %s35, %s51
      %p53 = scmp.eq.s32.totalorder %s27, 0
      %p54 = por %p52, %p53
      %s56 = sadd.s32 %s55, 1
      %p59 = scmp.eq.s32.totalorder %s21, 1
      %p60 = scmp.ne.s32.totalorder %s55, %s57
      %p61 = scmp.eq.s32.totalorder %s21, 0
      %p62 = por %p60, %p61
      %p63 = scmp.ne.s32.totalorder %s55, %s57
      %p64 = scmp.eq.s32.totalorder %s26, 1
      %p65 = por %p63, %p64
      %p66 = scmp.ne.s32.totalorder %s57, %s58
      %p67 = scmp.eq.s32.totalorder %s26, 0
      %p68 = por %p66, %p67
      %p69 = scmp.ne.s32.totalorder %s57, %s58
      %p70 = scmp.eq.s32.totalorder %s27, 1
      %p71 = por %p69, %p70
      %p73 = scmp.ne.s32.totalorder %s58, %s72
      %p74 = scmp.eq.s32.totalorder %s27, 0
      %p75 = por %p73, %p74
      %s77 = sadd.s32 %s76, 1
      %p80 = scmp.eq.s32.totalorder %s21, 1
      %p81 = scmp.ne.s32.totalorder %s76, %s78
      %p82 = scmp.eq.s32.totalorder %s21, 0
      %p83 = por %p81, %p82
      %p84 = scmp.ne.s32.totalorder %s76, %s78
      %p85 = scmp.eq.s32.totalorder %s26, 1
      %p86 = por %p84, %p85
      %p87 = scmp.ne.s32.totalorder %s78, %s79
      %p88 = scmp.eq.s32.totalorder %s26, 0
      %p89 = por %p87, %p88
      %p90 = scmp.ne.s32.totalorder %s78, %s79
      %p91 = scmp.eq.s32.totalorder %s27, 1
      %p92 = por %p90, %p91
      %p94 = scmp.ne.s32.totalorder %s79, %s93
      %p95 = scmp.eq.s32.totalorder %s27, 0
      %p96 = por %p94, %p95
      %s98 = sadd.s32 %s97, 1
      %p101 = scmp.eq.s32.totalorder %s21, 1
      %p102 = scmp.ne.s32.totalorder %s97, %s99
      %p103 = scmp.eq.s32.totalorder %s21, 0
      %p104 = por %p102, %p103
      %p105 = scmp.ne.s32.totalorder %s97, %s99
      %p106 = scmp.eq.s32.totalorder %s26, 1
      %p107 = por %p105, %p106
      %p108 = scmp.ne.s32.totalorder %s99, %s100
      %p109 = scmp.eq.s32.totalorder %s26, 0
      %p110 = por %p108, %p109
      %p111 = scmp.ne.s32.totalorder %s99, %s100
      %p112 = scmp.eq.s32.totalorder %s27, 1
      %p113 = por %p111, %p112
      %p115 = scmp.ne.s32.totalorder %s100, %s114
      %p116 = scmp.eq.s32.totalorder %s27, 0
      %p117 = por %p115, %p116
      %s119 = sadd.s32 %s118, 1
      %p122 = scmp.eq.s32.totalorder %s21, 1
      %p123 = scmp.ne.s32.totalorder %s118, %s120
      %p124 = scmp.eq.s32.totalorder %s21, 0
      %p125 = por %p123, %p124
      %p126 = scmp.ne.s32.totalorder %s118, %s120
      %p127 = scmp.eq.s32.totalorder %s26, 1
      %p128 = por %p126, %p127
      %p129 = scmp.ne.s32.totalorder %s120, %s121
      %p130 = scmp.eq.s32.totalorder %s26, 0
      %p131 = por %p129, %p130
      %p132 = scmp.ne.s32.totalorder %s120, %s121
      %p133 = scmp.eq.s32.totalorder %s27, 1
      %p134 = por %p132, %p133
      %p136 = scmp.ne.s32.totalorder %s121, %s135
      %p137 = scmp.eq.s32.totalorder %s27, 0
      %p138 = por %p136, %p137
      %s140 = sadd.s32 %s139, 1
      %p143 = scmp.eq.s32.totalorder %s21, 1
      %p144 = scmp.ne.s32.totalorder %s139, %s141
      %p145 = scmp.eq.s32.totalorder %s21, 0
      %p146 = por %p144, %p145
      %p147 = scmp.ne.s32.totalorder %s139, %s141
      %p148 = scmp.eq.s32.totalorder %s26, 1
      %p149 = por %p147, %p148
      %p150 = scmp.ne.s32.totalorder %s141, %s142
      %p151 = scmp.eq.s32.totalorder %s26, 0
      %p152 = por %p150, %p151
      %p153 = scmp.ne.s32.totalorder %s141, %s142
      %p154 = scmp.eq.s32.totalorder %s27, 1
      %p155 = por %p153, %p154
      %p157 = scmp.ne.s32.totalorder %s142, %s156
      %p158 = scmp.eq.s32.totalorder %s27, 0
      %p159 = por %p157, %p158
      %s161 = sadd.s32 %s160, 1
      %p164 = scmp.eq.s32.totalorder %s21, 1
      %p165 = scmp.ne.s32.totalorder %s160, %s162
      %p166 = scmp.eq.s32.totalorder %s21, 0
      %p167 = por %p165, %p166
      %p168 = scmp.ne.s32.totalorder %s160, %s162
      %p169 = scmp.eq.s32.totalorder %s26, 1
      %p170 = por %p168, %p169
      %p171 = scmp.ne.s32.totalorder %s162, %s163
      %p172 = scmp.eq.s32.totalorder %s26, 0
      %p173 = por %p171, %p172
      %p174 = scmp.ne.s32.totalorder %s162, %s163
      %p175 = scmp.eq.s32.totalorder %s27, 1
      %p176 = por %p174, %p175
      %p178 = scmp.ne.s32.totalorder %s163, %s177
      %p179 = scmp.eq.s32.totalorder %s27, 0
      %p180 = por %p178, %p179
      %s181 = ssub.s32 %s21, %s28
      %p182 = scmp.eq.s32.totalorder %s181, 0
      %s184 = sadd.s32 %s183, 1
      %s185 = scalar_select %p182, %s183, %s184
      %p188 = pneg %p182
      %p189 = scmp.eq.s32.totalorder %s21, 1
      %p190 = por %p188, %p189
      %p191 = scmp.ne.s32.totalorder %s183, %s186
      %p192 = scmp.eq.s32.totalorder %s21, 0
      %p193 = por %p191, %p192
      %p194 = scmp.ne.s32.totalorder %s183, %s186
      %p195 = scmp.eq.s32.totalorder %s26, 1
      %p196 = por %p194, %p195
      %p197 = scmp.ne.s32.totalorder %s186, %s187
      %p198 = scmp.eq.s32.totalorder %s26, 0
      %p199 = por %p197, %p198
      %p200 = scmp.ne.s32.totalorder %s186, %s187
      %p201 = scmp.eq.s32.totalorder %s27, 1
      %p202 = por %p200, %p201
      %p204 = scmp.ne.s32.totalorder %s187, %s203
      %p205 = scmp.eq.s32.totalorder %s27, 0
      %p206 = por %p204, %p205
      %p207 = scmp.le.s32.totalorder 1, %s21
      %p208 = scmp.lt.s32.totalorder %s21, 3
      %p209 = pnand %p207, %p208
      %p210 = pneg %p209
      // Predicated region
      $region9: #{tpu_custom_call.1} parent=5 // pred_check
        _
      $region10: #{tpu_custom_call.1} parent=5 // pred_check_branch
        %212 = sbr.rel (%p209) target = $region12
      $region11: #{tpu_custom_call.1} parent=5 // pred_region
        %s213 = ssub.s32 %s21, 1
        // Predicated region
        $region13: #{tpu_custom_call.1} parent=11 // pred_check
          %p214 = pneg %p68
        $region14: #{tpu_custom_call.1} parent=11 // pred_check_branch
          %216 = sbr.rel (%p214) target = $region16
        $region15: #{tpu_custom_call.1} parent=11 // pred_region
          %s218 = ssub.s32 1024, 1024
          %219 = vsyncadd [#allocation6], %s218
          %s220 = sshll.u32 [#allocation5], 4
          %s221 = int_to_ptr.vmem [resolvable:$true] %s220
          %226 = dma.hbm_to_vmem [thread:$0]  %s1, 1024, %s221, [#allocation6], 64, 64, 4
        $region16: #{tpu_custom_call.1} parent=11 // pred_fallthru
          _
        // Predicated region
        $region17: #{tpu_custom_call.1} parent=11 // pred_check
          %p227 = pneg %p89
        $region18: #{tpu_custom_call.1} parent=11 // pred_check_branch
          %229 = sbr.rel (%p227) target = $region20
        $region19: #{tpu_custom_call.1} parent=11 // pred_region
          _
        $region20: #{tpu_custom_call.1} parent=11 // pred_fallthru
          _
        // Predicated region
        $region21: #{tpu_custom_call.1} parent=11 // pred_check
          %p230 = pneg %p110
        $region22: #{tpu_custom_call.1} parent=11 // pred_check_branch
          %232 = sbr.rel (%p230) target = $region24
        $region23: #{tpu_custom_call.1} parent=11 // pred_region
          %s234 = ssub.s32 1024, 1024
          %235 = vsyncadd [#allocation6], %s234
          %s236 = sshll.u32 [#allocation7], 4
          %s237 = int_to_ptr.vmem [resolvable:$true] %s236
          %242 = dma.hbm_to_vmem [thread:$0]  %s3, 1024, %s237, [#allocation6], 64, 64, 4
        $region24: #{tpu_custom_call.1} parent=11 // pred_fallthru
          _
        // Predicated region
        $region25: #{tpu_custom_call.1} parent=11 // pred_check
          %p243 = pneg %p131
        $region26: #{tpu_custom_call.1} parent=11 // pred_check_branch
          %245 = sbr.rel (%p243) target = $region28
        $region27: #{tpu_custom_call.1} parent=11 // pred_region
          _
        $region28: #{tpu_custom_call.1} parent=11 // pred_fallthru
          _
        // Predicated region
        $region29: #{tpu_custom_call.1} parent=11 // pred_check
          %p246 = pneg %p152
        $region30: #{tpu_custom_call.1} parent=11 // pred_check_branch
          %248 = sbr.rel (%p246) target = $region32
        $region31: #{tpu_custom_call.1} parent=11 // pred_region
          %s250 = ssub.s32 1024, 1024
          %251 = vsyncadd [#allocation9], %s250
          %s252 = sshll.u32 [#allocation8], 4
          %s253 = int_to_ptr.vmem [resolvable:$true] %s252
          %258 = dma.hbm_to_vmem [thread:$0]  %s5, 1024, %s253, [#allocation9], 64, 64, 4
        $region32: #{tpu_custom_call.1} parent=11 // pred_fallthru
          _
        // Predicated region
        $region33: #{tpu_custom_call.1} parent=11 // pred_check
          %p259 = pneg %p173
        $region34: #{tpu_custom_call.1} parent=11 // pred_check_branch
          %261 = sbr.rel (%p259) target = $region36
        $region35: #{tpu_custom_call.1} parent=11 // pred_region
          _
        $region36: #{tpu_custom_call.1} parent=11 // pred_fallthru
          _
      $region12: #{tpu_custom_call.1} parent=5 // pred_fallthru
        _
      %p262 = scmp.lt.s32.totalorder %s21, 2
      // Predicated region
      $region37: #{tpu_custom_call.1} parent=5 // pred_check
        %p263 = pneg %p262
      $region38: #{tpu_custom_call.1} parent=5 // pred_check_branch
        %265 = sbr.rel (%p263) target = $region40
      $region39: #{tpu_custom_call.1} parent=5 // pred_region
        // Predicated region
        $region41: #{tpu_custom_call.1} parent=39 // pred_check
          %p266 = pneg %p41
        $region42: #{tpu_custom_call.1} parent=39 // pred_check_branch
          %268 = sbr.rel (%p266) target = $region44
        $region43: #{tpu_custom_call.1} parent=39 // pred_region
          %s269 = sand.u32 %s31, 1
          %s270 = scalar_lea.sflag [#allocation3], %s269
          %s271 = sand.u32 %s31, 1
          %s272 = smul.addr %s271, 128
          %s273 = scalar_lea.vmem [#allocation2], %s272
          %s274 = smul.u32 32, %s21
          %s276 = ssub.s32 2048, 2048
          %277 = vsyncadd %s270, %s276
          %s278 = smul.addr %s274, 64
          %s279 = scalar_lea.hbm %s0, %s278
          %s280 = sshll.u32 %s273, 4
          %s281 = int_to_ptr.vmem [resolvable:$true] %s280
          %286 = dma.hbm_to_vmem [thread:$0]  %s279, 2048, %s281, %s270, 64, 64, 4
        $region44: #{tpu_custom_call.1} parent=39 // pred_fallthru
          _
      $region40: #{tpu_custom_call.1} parent=5 // pred_fallthru
        _
      %p287 = scmp.le.s32.totalorder 1, %s21
      %p288 = scmp.lt.s32.totalorder %s21, 3
      %p289 = pnand %p287, %p288
      %p290 = pneg %p289
      // Predicated region
      $region45: #{tpu_custom_call.1} parent=5 // pred_check
        _
      $region46: #{tpu_custom_call.1} parent=5 // pred_check_branch
        %292 = sbr.rel (%p289) target = $region48
      $region47: #{tpu_custom_call.1} parent=5 // pred_region
        %s293 = ssub.s32 %s21, 1
        %s294 = sand.u32 %s34, 1
        %s295 = scalar_lea.sflag [#allocation3], %s294
        %s296 = sand.u32 %s34, 1
        %s297 = smul.addr %s296, 128
        %s298 = scalar_lea.vmem [#allocation2], %s297
        // Predicated region
        $region49: #{tpu_custom_call.1} parent=47 // pred_check
          %p299 = pneg %p47
        $region50: #{tpu_custom_call.1} parent=47 // pred_check_branch
          %301 = sbr.rel (%p299) target = $region52
        $region51: #{tpu_custom_call.1} parent=47 // pred_region
          %302 = dma.done %s295, 2048
        $region52: #{tpu_custom_call.1} parent=47 // pred_fallthru
          _
        // Predicated region
        $region53: #{tpu_custom_call.1} parent=47 // pred_check
          %p303 = pneg %p68
        $region54: #{tpu_custom_call.1} parent=47 // pred_check_branch
          %305 = sbr.rel (%p303) target = $region56
        $region55: #{tpu_custom_call.1} parent=47 // pred_region
          %306 = dma.done [#allocation6], 1024
        $region56: #{tpu_custom_call.1} parent=47 // pred_fallthru
          _
        // Predicated region
        $region57: #{tpu_custom_call.1} parent=47 // pred_check
          %p307 = pneg %p110
        $region58: #{tpu_custom_call.1} parent=47 // pred_check_branch
          %309 = sbr.rel (%p307) target = $region60
        $region59: #{tpu_custom_call.1} parent=47 // pred_region
          %310 = dma.done [#allocation6], 1024
        $region60: #{tpu_custom_call.1} parent=47 // pred_fallthru
          _
        // Predicated region
        $region61: #{tpu_custom_call.1} parent=47 // pred_check
          %p311 = pneg %p152
        $region62: #{tpu_custom_call.1} parent=47 // pred_check_branch
          %313 = sbr.rel (%p311) target = $region64
        $region63: #{tpu_custom_call.1} parent=47 // pred_region
          %314 = dma.done [#allocation9], 1024
        $region64: #{tpu_custom_call.1} parent=47 // pred_fallthru
          _
        %s315 = sand.u32 %s34, 1
        %s316 = scalar_lea.sflag [#allocation3], %s315
        %s317 = sand.u32 %s34, 1
        %s318 = smul.addr %s317, 128
        %s319 = scalar_lea.vmem [#allocation2], %s318
        %p320 = pneg %p47
        %p321 = pneg %p44
        %p322 = pneg %p68
        %p323 = pneg %p65
        %p324 = pneg %p89
        %p325 = pneg %p86
        %p326 = pneg %p110
        %p327 = pneg %p107
        %p328 = pneg %p131
        %p329 = pneg %p128
        %p330 = pneg %p152
        %p331 = pneg %p149
        %p332 = pneg %p173
        %p333 = pneg %p170
        %p334 = pneg %p199
        %p335 = pneg %p196
        %s336 = sand.u32 %s186, 1
        %s337 = scalar_lea.sflag [#allocation4], %s336
        %s338 = sand.u32 %s186, 1
        %s339 = smul.addr %s338, 256
        %s340 = scalar_lea.vmem [#allocation10], %s339
        %s341 = smul.u32 32, %s26
        %s342 = smul.u32 32, %s26
        %v344 = vld [vmem:[%s298] sm:$0xf]
        %v345 = vld [vmem:[%s298 + $0x4] sm:$0xf]
        %v346 = vld [vmem:[%s298 + $0x8] sm:$0xf]
        %v347 = vld [vmem:[%s298 + $0xc] sm:$0xf]
        %v348 = vld [vmem:[%s298 + $0x10] sm:$0xf]
        %v349 = vld [vmem:[%s298 + $0x14] sm:$0xf]
        %v350 = vld [vmem:[%s298 + $0x18] sm:$0xf]
        %v351 = vld [vmem:[%s298 + $0x1c] sm:$0xf]
        %v352 = vld [vmem:[%s298 + $0x20] sm:$0xf]
        %v353 = vld [vmem:[%s298 + $0x24] sm:$0xf]
        %v354 = vld [vmem:[%s298 + $0x28] sm:$0xf]
        %v355 = vld [vmem:[%s298 + $0x2c] sm:$0xf]
        %v356 = vld [vmem:[%s298 + $0x30] sm:$0xf]
        %v357 = vld [vmem:[%s298 + $0x34] sm:$0xf]
        %v358 = vld [vmem:[%s298 + $0x38] sm:$0xf]
        %v359 = vld [vmem:[%s298 + $0x3c] sm:$0xf]
        %v360 = vld [vmem:[%s298 + $0x40] sm:$0xf]
        %v361 = vld [vmem:[%s298 + $0x44] sm:$0xf]
        %v362 = vld [vmem:[%s298 + $0x48] sm:$0xf]
        %v363 = vld [vmem:[%s298 + $0x4c] sm:$0xf]
        %v364 = vld [vmem:[%s298 + $0x50] sm:$0xf]
        %v365 = vld [vmem:[%s298 + $0x54] sm:$0xf]
        %v366 = vld [vmem:[%s298 + $0x58] sm:$0xf]
        %v367 = vld [vmem:[%s298 + $0x5c] sm:$0xf]
        %v368 = vld [vmem:[%s298 + $0x60] sm:$0xf]
        %v369 = vld [vmem:[%s298 + $0x64] sm:$0xf]
        %v370 = vld [vmem:[%s298 + $0x68] sm:$0xf]
        %v371 = vld [vmem:[%s298 + $0x6c] sm:$0xf]
        %v372 = vld [vmem:[%s298 + $0x70] sm:$0xf]
        %v373 = vld [vmem:[%s298 + $0x74] sm:$0xf]
        %v374 = vld [vmem:[%s298 + $0x78] sm:$0xf]
        %v375 = vld [vmem:[%s298 + $0x7c] sm:$0xf]
        %v376 = vld [vmem:[#allocation5] sm:$0xf]
        %v377 = vld [vmem:[#allocation5 + $0x4] sm:$0xf]
        %v378 = vld [vmem:[#allocation5 + $0x8] sm:$0xf]
        %v379 = vld [vmem:[#allocation5 + $0xc] sm:$0xf]
        %v380 = vld [vmem:[#allocation5 + $0x10] sm:$0xf]
        %v381 = vld [vmem:[#allocation5 + $0x14] sm:$0xf]
        %v382 = vld [vmem:[#allocation5 + $0x18] sm:$0xf]
        %v383 = vld [vmem:[#allocation5 + $0x1c] sm:$0xf]
        %v384 = vld [vmem:[#allocation5 + $0x20] sm:$0xf]
        %v385 = vld [vmem:[#allocation5 + $0x24] sm:$0xf]
        %v386 = vld [vmem:[#allocation5 + $0x28] sm:$0xf]
        %v387 = vld [vmem:[#allocation5 + $0x2c] sm:$0xf]
        %v388 = vld [vmem:[#allocation5 + $0x30] sm:$0xf]
        %v389 = vld [vmem:[#allocation5 + $0x34] sm:$0xf]
        %v390 = vld [vmem:[#allocation5 + $0x38] sm:$0xf]
        %v391 = vld [vmem:[#allocation5 + $0x3c] sm:$0xf]
        %v392 = vld [vmem:[%s2] sm:$0x1]
        %v394 = vlaneseq
        %v395 = vshrl.u32 %v394, 7
        %v396 = vsub.s32 0, %v395
        %v397 = vrot.slane %v392, %v396
        %v431 = vunpack.c.l.b16 %v344
        %v432 = vunpack.c.l.b16 %v345
        %v433 = vunpack.c.l.b16 %v346
        %v434 = vunpack.c.l.b16 %v347
        %v435 = vunpack.c.l.b16 %v348
        %v436 = vunpack.c.l.b16 %v349
        %v437 = vunpack.c.l.b16 %v350
        %v438 = vunpack.c.l.b16 %v351
        %v439 = vunpack.c.l.b16 %v352
        %v440 = vunpack.c.l.b16 %v353
        %v441 = vunpack.c.l.b16 %v354
        %v442 = vunpack.c.l.b16 %v355
        %v443 = vunpack.c.l.b16 %v356
        %v444 = vunpack.c.l.b16 %v357
        %v445 = vunpack.c.l.b16 %v358
        %v446 = vunpack.c.l.b16 %v359
        %v447 = vunpack.c.l.b16 %v360
        %v448 = vunpack.c.l.b16 %v361
        %v449 = vunpack.c.l.b16 %v362
        %v450 = vunpack.c.l.b16 %v363
        %v451 = vunpack.c.l.b16 %v364
        %v452 = vunpack.c.l.b16 %v365
        %v453 = vunpack.c.l.b16 %v366
        %v454 = vunpack.c.l.b16 %v367
        %v455 = vunpack.c.l.b16 %v368
        %v456 = vunpack.c.l.b16 %v369
        %v457 = vunpack.c.l.b16 %v370
        %v458 = vunpack.c.l.b16 %v371
        %v459 = vunpack.c.l.b16 %v372
        %v460 = vunpack.c.l.b16 %v373
        %v461 = vunpack.c.l.b16 %v374
        %v462 = vunpack.c.l.b16 %v375
        %v463 = vpack.c.b16 %v432, %v431
        %v464 = vpack.c.b16 %v434, %v433
        %v465 = vpack.c.b16 %v436, %v435
        %v466 = vpack.c.b16 %v438, %v437
        %v467 = vpack.c.b16 %v440, %v439
        %v468 = vpack.c.b16 %v442, %v441
        %v469 = vpack.c.b16 %v444, %v443
        %v470 = vpack.c.b16 %v446, %v445
        %v471 = vpack.c.b16 %v448, %v447
        %v472 = vpack.c.b16 %v450, %v449
        %v473 = vpack.c.b16 %v452, %v451
        %v474 = vpack.c.b16 %v454, %v453
        %v475 = vpack.c.b16 %v456, %v455
        %v476 = vpack.c.b16 %v458, %v457
        %v477 = vpack.c.b16 %v460, %v459
        %v478 = vpack.c.b16 %v462, %v461
        %v511 = vunpack.c.l.b16 %v376
        %v512 = vunpack.c.l.b16 %v377
        %v513 = vunpack.c.l.b16 %v378
        %v514 = vunpack.c.l.b16 %v379
        %v515 = vunpack.c.l.b16 %v380
        %v516 = vunpack.c.l.b16 %v381
        %v517 = vunpack.c.l.b16 %v382
        %v518 = vunpack.c.l.b16 %v383
        %v519 = vunpack.c.l.b16 %v384
        %v520 = vunpack.c.l.b16 %v385
        %v521 = vunpack.c.l.b16 %v386
        %v522 = vunpack.c.l.b16 %v387
        %v523 = vunpack.c.l.b16 %v388
        %v524 = vunpack.c.l.b16 %v389
        %v525 = vunpack.c.l.b16 %v390
        %v526 = vunpack.c.l.b16 %v391
        %v527 = vpack.c.b16 %v512, %v511
        %v528 = vpack.c.b16 %v514, %v513
        %v529 = vpack.c.b16 %v516, %v515
        %v530 = vpack.c.b16 %v518, %v517
        %v531 = vpack.c.b16 %v520, %v519
        %v532 = vpack.c.b16 %v522, %v521
        %v533 = vpack.c.b16 %v524, %v523
        %v534 = vpack.c.b16 %v526, %v525
        %543 = vmatprep.subr.bf16.mxu0 0
        %544 = vmatpush1.bf16.msra.mxu0 %v527
        %545 = vmatprep.subr.bf16.mxu0 0
        %546 = vmatpush1.bf16.msra.mxu0 %v528
        %547 = vmatprep.subr.bf16.mxu0 0
        %548 = vmatpush1.bf16.msra.mxu0 %v529
        %549 = vmatprep.subr.bf16.mxu0 0
        %550 = vmatpush1.bf16.msra.mxu0 %v530
        %551 = vmatprep.subr.bf16.mxu0 0
        %552 = vmatpush1.bf16.msra.mxu0 %v531
        %553 = vmatprep.subr.bf16.mxu0 0
        %554 = vmatpush1.bf16.msra.mxu0 %v532
        %555 = vmatprep.subr.bf16.mxu0 0
        %556 = vmatpush1.bf16.msra.mxu0 %v533
        %557 = vmatprep.subr.bf16.mxu0 0
        %558 = vmatpush1.bf16.msra.mxu0 %v534
        %559 = vmatprep.subr.bf16.mxu0 0
        %560 = vmatpush1.bf16.msra.mxu0 0
        %561 = vmatprep.subr.bf16.mxu0 0
        %562 = vmatpush1.bf16.msra.mxu0 0
        %563 = vmatprep.subr.bf16.mxu0 0
        %564 = vmatpush1.bf16.msra.mxu0 0
        %565 = vmatprep.subr.bf16.mxu0 0
        %566 = vmatpush1.bf16.msra.mxu0 0
        %567 = vmatprep.subr.bf16.mxu0 0
        %568 = vmatpush1.bf16.msra.mxu0 0
        %569 = vmatprep.subr.bf16.mxu0 0
        %570 = vmatpush1.bf16.msra.mxu0 0
        %571 = vmatprep.subr.bf16.mxu0 0
        %572 = vmatpush1.bf16.msra.mxu0 0
        %573 = vmatprep.subr.bf16.mxu0 0
        %574 = vmatpush1.bf16.msra.mxu0 0
        %575 = vmatprep.mubr.bf16.mxu0 0
        %576 = vmatmul.mubr.bf16.gmra.mrb[0].mxu0 %v463
        %v577 = vpop.f32.mrb[0].mxu0
        %v578 = vadd.f32 %v397, %v577
        %v579 = vpop.f32.mrb[0].mxu0
        %v580 = vpop.f32.mrb[0].mxu0
        %v581 = vadd.f32 %v397, %v580
        %v582 = vpop.f32.mrb[0].mxu0
        %583 = vmatprep.mubr.bf16.mxu0 0
        %584 = vmatmul.mubr.bf16.gmra.mrb[0].mxu0 %v464
        %v585 = vpop.f32.mrb[0].mxu0
        %v586 = vadd.f32 %v397, %v585
        %v587 = vpop.f32.mrb[0].mxu0
        %v588 = vpop.f32.mrb[0].mxu0
        %v589 = vadd.f32 %v397, %v588
        %v590 = vpop.f32.mrb[0].mxu0
        %591 = vmatprep.mubr.bf16.mxu0 0
        %592 = vmatmul.mubr.bf16.gmra.mrb[0].mxu0 %v465
        %v593 = vpop.f32.mrb[0].mxu0
        %v594 = vadd.f32 %v397, %v593
        %v595 = vpop.f32.mrb[0].mxu0
        %v596 = vpop.f32.mrb[0].mxu0
        %v597 = vadd.f32 %v397, %v596
        %v598 = vpop.f32.mrb[0].mxu0
        %599 = vmatprep.mubr.bf16.mxu0 0
        %600 = vmatmul.mubr.bf16.gmra.mrb[0].mxu0 %v466
        %v601 = vpop.f32.mrb[0].mxu0
        %v602 = vadd.f32 %v397, %v601
        %v603 = vpop.f32.mrb[0].mxu0
        %v604 = vpop.f32.mrb[0].mxu0
        %v605 = vadd.f32 %v397, %v604
        %v606 = vpop.f32.mrb[0].mxu0
        %607 = vmatprep.mubr.bf16.mxu0 0
        %608 = vmatmul.mubr.bf16.gmra.mrb[0].mxu0 %v467
        %v609 = vpop.f32.mrb[0].mxu0
        %v610 = vadd.f32 %v397, %v609
        %v611 = vpop.f32.mrb[0].mxu0
        %v612 = vpop.f32.mrb[0].mxu0
        %v613 = vadd.f32 %v397, %v612
        %v614 = vpop.f32.mrb[0].mxu0
        %615 = vmatprep.mubr.bf16.mxu0 0
        %616 = vmatmul.mubr.bf16.gmra.mrb[0].mxu0 %v468
        %v617 = vpop.f32.mrb[0].mxu0
        %v618 = vadd.f32 %v397, %v617
        %v619 = vpop.f32.mrb[0].mxu0
        %v620 = vpop.f32.mrb[0].mxu0
        %v621 = vadd.f32 %v397, %v620
        %v622 = vpop.f32.mrb[0].mxu0
        %623 = vmatprep.mubr.bf16.mxu0 0
        %624 = vmatmul.mubr.bf16.gmra.mrb[0].mxu0 %v469
        %v625 = vpop.f32.mrb[0].mxu0
        %v626 = vadd.f32 %v397, %v625
        %v627 = vpop.f32.mrb[0].mxu0
        %v628 = vpop.f32.mrb[0].mxu0
        %v629 = vadd.f32 %v397, %v628
        %v630 = vpop.f32.mrb[0].mxu0
        %631 = vmatprep.mubr.bf16.mxu0 0
        %632 = vmatmul.mubr.bf16.gmra.mrb[0].mxu0 %v470
        %v633 = vpop.f32.mrb[0].mxu0
        %v634 = vadd.f32 %v397, %v633
        %v635 = vpop.f32.mrb[0].mxu0
        %v636 = vpop.f32.mrb[0].mxu0
        %v637 = vadd.f32 %v397, %v636
        %v638 = vpop.f32.mrb[0].mxu0
        %639 = vmatprep.mubr.bf16.mxu0 0
        %640 = vmatmul.mubr.bf16.gmra.mrb[0].mxu0 %v471
        %v641 = vpop.f32.mrb[0].mxu0
        %v642 = vadd.f32 %v397, %v641
        %v643 = vpop.f32.mrb[0].mxu0
        %v644 = vpop.f32.mrb[0].mxu0
        %v645 = vadd.f32 %v397, %v644
        %v646 = vpop.f32.mrb[0].mxu0
        %647 = vmatprep.mubr.bf16.mxu0 0
        %648 = vmatmul.mubr.bf16.gmra.mrb[0].mxu0 %v472
        %v649 = vpop.f32.mrb[0].mxu0
        %v650 = vadd.f32 %v397, %v649
        %v651 = vpop.f32.mrb[0].mxu0
        %v652 = vpop.f32.mrb[0].mxu0
        %v653 = vadd.f32 %v397, %v652
        %v654 = vpop.f32.mrb[0].mxu0
        %655 = vmatprep.mubr.bf16.mxu0 0
        %656 = vmatmul.mubr.bf16.gmra.mrb[0].mxu0 %v473
        %v657 = vpop.f32.mrb[0].mxu0
        %v658 = vadd.f32 %v397, %v657
        %v659 = vpop.f32.mrb[0].mxu0
        %v660 = vpop.f32.mrb[0].mxu0
        %v661 = vadd.f32 %v397, %v660
        %v662 = vpop.f32.mrb[0].mxu0
        %663 = vmatprep.mubr.bf16.mxu0 0
        %664 = vmatmul.mubr.bf16.gmra.mrb[0].mxu0 %v474
        %v665 = vpop.f32.mrb[0].mxu0
        %v666 = vadd.f32 %v397, %v665
        %v667 = vpop.f32.mrb[0].mxu0
        %v668 = vpop.f32.mrb[0].mxu0
        %v669 = vadd.f32 %v397, %v668
        %v670 = vpop.f32.mrb[0].mxu0
        %671 = vmatprep.mubr.bf16.mxu0 0
        %672 = vmatmul.mubr.bf16.gmra.mrb[0].mxu0 %v475
        %v673 = vpop.f32.mrb[0].mxu0
        %v674 = vadd.f32 %v397, %v673
        %v675 = vpop.f32.mrb[0].mxu0
        %v676 = vpop.f32.mrb[0].mxu0
        %v677 = vadd.f32 %v397, %v676
        %v678 = vpop.f32.mrb[0].mxu0
        %679 = vmatprep.mubr.bf16.mxu0 0
        %680 = vmatmul.mubr.bf16.gmra.mrb[0].mxu0 %v476
        %v681 = vpop.f32.mrb[0].mxu0
        %v682 = vadd.f32 %v397, %v681
        %v683 = vpop.f32.mrb[0].mxu0
        %v684 = vpop.f32.mrb[0].mxu0
        %v685 = vadd.f32 %v397, %v684
        %v686 = vpop.f32.mrb[0].mxu0
        %687 = vmatprep.mubr.bf16.mxu0 0
        %688 = vmatmul.mubr.bf16.gmra.mrb[0].mxu0 %v477
        %v689 = vpop.f32.mrb[0].mxu0
        %v690 = vadd.f32 %v397, %v689
        %v691 = vpop.f32.mrb[0].mxu0
        %v692 = vpop.f32.mrb[0].mxu0
        %v693 = vadd.f32 %v397, %v692
        %v694 = vpop.f32.mrb[0].mxu0
        %695 = vmatprep.mubr.bf16.mxu0 0
        %696 = vmatmul.mubr.bf16.gmra.mrb[0].mxu0 %v478
        %v697 = vpop.f32.mrb[0].mxu0
        %v698 = vadd.f32 %v397, %v697
        %v699 = vpop.f32.mrb[0].mxu0
        %v700 = vpop.f32.mrb[0].mxu0
        %v701 = vadd.f32 %v397, %v700
        %v702 = vpop.f32.mrb[0].mxu0
        %703 = vdwg.mxu0
        %v704 = vmax.f32 %v578, 0.0
        %v705 = vmax.f32 %v581, 0.0
        %v706 = vmax.f32 %v586, 0.0
        %v707 = vmax.f32 %v589, 0.0
        %v708 = vmax.f32 %v594, 0.0
        %v709 = vmax.f32 %v597, 0.0
        %v710 = vmax.f32 %v602, 0.0
        %v711 = vmax.f32 %v605, 0.0
        %v712 = vmax.f32 %v610, 0.0
        %v713 = vmax.f32 %v613, 0.0
        %v714 = vmax.f32 %v618, 0.0
        %v715 = vmax.f32 %v621, 0.0
        %v716 = vmax.f32 %v626, 0.0
        %v717 = vmax.f32 %v629, 0.0
        %v718 = vmax.f32 %v634, 0.0
        %v719 = vmax.f32 %v637, 0.0
        %v720 = vmax.f32 %v642, 0.0
        %v721 = vmax.f32 %v645, 0.0
        %v722 = vmax.f32 %v650, 0.0
        %v723 = vmax.f32 %v653, 0.0
        %v724 = vmax.f32 %v658, 0.0
        %v725 = vmax.f32 %v661, 0.0
        %v726 = vmax.f32 %v666, 0.0
        %v727 = vmax.f32 %v669, 0.0
        %v728 = vmax.f32 %v674, 0.0
        %v729 = vmax.f32 %v677, 0.0
        %v730 = vmax.f32 %v682, 0.0
        %v731 = vmax.f32 %v685, 0.0
        %v732 = vmax.f32 %v690, 0.0
        %v733 = vmax.f32 %v693, 0.0
        %v734 = vmax.f32 %v698, 0.0
        %v735 = vmax.f32 %v701, 0.0
        %v736 = vpack.c.bf16 %v705, %v704
        %v737 = vpack.c.bf16 %v707, %v706
        %v738 = vpack.c.bf16 %v709, %v708
        %v739 = vpack.c.bf16 %v711, %v710
        %v740 = vpack.c.bf16 %v713, %v712
        %v741 = vpack.c.bf16 %v715, %v714
        %v742 = vpack.c.bf16 %v717, %v716
        %v743 = vpack.c.bf16 %v719, %v718
        %v744 = vpack.c.bf16 %v721, %v720
        %v745 = vpack.c.bf16 %v723, %v722
        %v746 = vpack.c.bf16 %v725, %v724
        %v747 = vpack.c.bf16 %v727, %v726
        %v748 = vpack.c.bf16 %v729, %v728
        %v749 = vpack.c.bf16 %v731, %v730
        %v750 = vpack.c.bf16 %v733, %v732
        %v751 = vpack.c.bf16 %v735, %v734
        %v752 = vld [vmem:[#allocation7] sm:$0xf]
        %v753 = vld [vmem:[#allocation7 + $0x4] sm:$0xf]
        %v754 = vld [vmem:[#allocation7 + $0x8] sm:$0xf]
        %v755 = vld [vmem:[#allocation7 + $0xc] sm:$0xf]
        %v756 = vld [vmem:[#allocation7 + $0x10] sm:$0xf]
        %v757 = vld [vmem:[#allocation7 + $0x14] sm:$0xf]
        %v758 = vld [vmem:[#allocation7 + $0x18] sm:$0xf]
        %v759 = vld [vmem:[#allocation7 + $0x1c] sm:$0xf]
        %v760 = vld [vmem:[#allocation7 + $0x20] sm:$0xf]
        %v761 = vld [vmem:[#allocation7 + $0x24] sm:$0xf]
        %v762 = vld [vmem:[#allocation7 + $0x28] sm:$0xf]
        %v763 = vld [vmem:[#allocation7 + $0x2c] sm:$0xf]
        %v764 = vld [vmem:[#allocation7 + $0x30] sm:$0xf]
        %v765 = vld [vmem:[#allocation7 + $0x34] sm:$0xf]
        %v766 = vld [vmem:[#allocation7 + $0x38] sm:$0xf]
        %v767 = vld [vmem:[#allocation7 + $0x3c] sm:$0xf]
        %v768 = vld [vmem:[%s4] sm:$0x1]
        %v770 = vlaneseq
        %v771 = vshrl.u32 %v770, 7
        %v772 = vsub.s32 0, %v771
        %v773 = vrot.slane %v768, %v772
        %v791 = vunpack.c.l.b16 %v752
        %v792 = vunpack.c.l.b16 %v753
        %v793 = vunpack.c.l.b16 %v754
        %v794 = vunpack.c.l.b16 %v755
        %v795 = vunpack.c.l.b16 %v756
        %v796 = vunpack.c.l.b16 %v757
        %v797 = vunpack.c.l.b16 %v758
        %v798 = vunpack.c.l.b16 %v759
        %v799 = vunpack.c.l.b16 %v760
        %v800 = vunpack.c.l.b16 %v761
        %v801 = vunpack.c.l.b16 %v762
        %v802 = vunpack.c.l.b16 %v763
        %v803 = vunpack.c.l.b16 %v764
        %v804 = vunpack.c.l.b16 %v765
        %v805 = vunpack.c.l.b16 %v766
        %v806 = vunpack.c.l.b16 %v767
        %v807 = vpack.c.b16 %v792, %v791
        %v808 = vpack.c.b16 %v794, %v793
        %v809 = vpack.c.b16 %v796, %v795
        %v810 = vpack.c.b16 %v798, %v797
        %v811 = vpack.c.b16 %v800, %v799
        %v812 = vpack.c.b16 %v802, %v801
        %v813 = vpack.c.b16 %v804, %v803
        %v814 = vpack.c.b16 %v806, %v805
        %823 = vmatprep.subr.bf16.mxu0 0
        %824 = vmatpush1.bf16.msra.mxu0 %v807
        %825 = vmatprep.subr.bf16.mxu0 0
        %826 = vmatpush1.bf16.msra.mxu0 %v808
        %827 = vmatprep.subr.bf16.mxu0 0
        %828 = vmatpush1.bf16.msra.mxu0 %v809
        %829 = vmatprep.subr.bf16.mxu0 0
        %830 = vmatpush1.bf16.msra.mxu0 %v810
        %831 = vmatprep.subr.bf16.mxu0 0
        %832 = vmatpush1.bf16.msra.mxu0 %v811
        %833 = vmatprep.subr.bf16.mxu0 0
        %834 = vmatpush1.bf16.msra.mxu0 %v812
        %835 = vmatprep.subr.bf16.mxu0 0
        %836 = vmatpush1.bf16.msra.mxu0 %v813
        %837 = vmatprep.subr.bf16.mxu0 0
        %838 = vmatpush1.bf16.msra.mxu0 %v814
        %839 = vmatprep.subr.bf16.mxu0 0
        %840 = vmatpush1.bf16.msra.mxu0 0
        %841 = vmatprep.subr.bf16.mxu0 0
        %842 = vmatpush1.bf16.msra.mxu0 0
        %843 = vmatprep.subr.bf16.mxu0 0
        %844 = vmatpush1.bf16.msra.mxu0 0
        %845 = vmatprep.subr.bf16.mxu0 0
        %846 = vmatpush1.bf16.msra.mxu0 0
        %847 = vmatprep.subr.bf16.mxu0 0
        %848 = vmatpush1.bf16.msra.mxu0 0
        %849 = vmatprep.subr.bf16.mxu0 0
        %850 = vmatpush1.bf16.msra.mxu0 0
        %851 = vmatprep.subr.bf16.mxu0 0
        %852 = vmatpush1.bf16.msra.mxu0 0
        %853 = vmatprep.subr.bf16.mxu0 0
        %854 = vmatpush1.bf16.msra.mxu0 0
        %855 = vmatprep.mubr.bf16.mxu0 0
        %856 = vmatmul.mubr.bf16.gmra.mrb[0].mxu0 %v736
        %v857 = vpop.f32.mrb[0].mxu0
        %v858 = vadd.f32 %v773, %v857
        %v859 = vpop.f32.mrb[0].mxu0
        %v860 = vpop.f32.mrb[0].mxu0
        %v861 = vadd.f32 %v773, %v860
        %v862 = vpop.f32.mrb[0].mxu0
        %863 = vmatprep.mubr.bf16.mxu0 0
        %864 = vmatmul.mubr.bf16.gmra.mrb[0].mxu0 %v737
        %v865 = vpop.f32.mrb[0].mxu0
        %v866 = vadd.f32 %v773, %v865
        %v867 = vpop.f32.mrb[0].mxu0
        %v868 = vpop.f32.mrb[0].mxu0
        %v869 = vadd.f32 %v773, %v868
        %v870 = vpop.f32.mrb[0].mxu0
        %871 = vmatprep.mubr.bf16.mxu0 0
        %872 = vmatmul.mubr.bf16.gmra.mrb[0].mxu0 %v738
        %v873 = vpop.f32.mrb[0].mxu0
        %v874 = vadd.f32 %v773, %v873
        %v875 = vpop.f32.mrb[0].mxu0
        %v876 = vpop.f32.mrb[0].mxu0
        %v877 = vadd.f32 %v773, %v876
        %v878 = vpop.f32.mrb[0].mxu0
        %879 = vmatprep.mubr.bf16.mxu0 0
        %880 = vmatmul.mubr.bf16.gmra.mrb[0].mxu0 %v739
        %v881 = vpop.f32.mrb[0].mxu0
        %v882 = vadd.f32 %v773, %v881
        %v883 = vpop.f32.mrb[0].mxu0
        %v884 = vpop.f32.mrb[0].mxu0
        %v885 = vadd.f32 %v773, %v884
        %v886 = vpop.f32.mrb[0].mxu0
        %887 = vmatprep.mubr.bf16.mxu0 0
        %888 = vmatmul.mubr.bf16.gmra.mrb[0].mxu0 %v740
        %v889 = vpop.f32.mrb[0].mxu0
        %v890 = vadd.f32 %v773, %v889
        %v891 = vpop.f32.mrb[0].mxu0
        %v892 = vpop.f32.mrb[0].mxu0
        %v893 = vadd.f32 %v773, %v892
        %v894 = vpop.f32.mrb[0].mxu0
        %895 = vmatprep.mubr.bf16.mxu0 0
        %896 = vmatmul.mubr.bf16.gmra.mrb[0].mxu0 %v741
        %v897 = vpop.f32.mrb[0].mxu0
        %v898 = vadd.f32 %v773, %v897
        %v899 = vpop.f32.mrb[0].mxu0
        %v900 = vpop.f32.mrb[0].mxu0
        %v901 = vadd.f32 %v773, %v900
        %v902 = vpop.f32.mrb[0].mxu0
        %903 = vmatprep.mubr.bf16.mxu0 0
        %904 = vmatmul.mubr.bf16.gmra.mrb[0].mxu0 %v742
        %v905 = vpop.f32.mrb[0].mxu0
        %v906 = vadd.f32 %v773, %v905
        %v907 = vpop.f32.mrb[0].mxu0
        %v908 = vpop.f32.mrb[0].mxu0
        %v909 = vadd.f32 %v773, %v908
        %v910 = vpop.f32.mrb[0].mxu0
        %911 = vmatprep.mubr.bf16.mxu0 0
        %912 = vmatmul.mubr.bf16.gmra.mrb[0].mxu0 %v743
        %v913 = vpop.f32.mrb[0].mxu0
        %v914 = vadd.f32 %v773, %v913
        %v915 = vpop.f32.mrb[0].mxu0
        %v916 = vpop.f32.mrb[0].mxu0
        %v917 = vadd.f32 %v773, %v916
        %v918 = vpop.f32.mrb[0].mxu0
        %919 = vmatprep.mubr.bf16.mxu0 0
        %920 = vmatmul.mubr.bf16.gmra.mrb[0].mxu0 %v744
        %v921 = vpop.f32.mrb[0].mxu0
        %v922 = vadd.f32 %v773, %v921
        %v923 = vpop.f32.mrb[0].mxu0
        %v924 = vpop.f32.mrb[0].mxu0
        %v925 = vadd.f32 %v773, %v924
        %v926 = vpop.f32.mrb[0].mxu0
        %927 = vmatprep.mubr.bf16.mxu0 0
        %928 = vmatmul.mubr.bf16.gmra.mrb[0].mxu0 %v745
        %v929 = vpop.f32.mrb[0].mxu0
        %v930 = vadd.f32 %v773, %v929
        %v931 = vpop.f32.mrb[0].mxu0
        %v932 = vpop.f32.mrb[0].mxu0
        %v933 = vadd.f32 %v773, %v932
        %v934 = vpop.f32.mrb[0].mxu0
        %935 = vmatprep.mubr.bf16.mxu0 0
        %936 = vmatmul.mubr.bf16.gmra.mrb[0].mxu0 %v746
        %v937 = vpop.f32.mrb[0].mxu0
        %v938 = vadd.f32 %v773, %v937
        %v939 = vpop.f32.mrb[0].mxu0
        %v940 = vpop.f32.mrb[0].mxu0
        %v941 = vadd.f32 %v773, %v940
        %v942 = vpop.f32.mrb[0].mxu0
        %943 = vmatprep.mubr.bf16.mxu0 0
        %944 = vmatmul.mubr.bf16.gmra.mrb[0].mxu0 %v747
        %v945 = vpop.f32.mrb[0].mxu0
        %v946 = vadd.f32 %v773, %v945
        %v947 = vpop.f32.mrb[0].mxu0
        %v948 = vpop.f32.mrb[0].mxu0
        %v949 = vadd.f32 %v773, %v948
        %v950 = vpop.f32.mrb[0].mxu0
        %951 = vmatprep.mubr.bf16.mxu0 0
        %952 = vmatmul.mubr.bf16.gmra.mrb[0].mxu0 %v748
        %v953 = vpop.f32.mrb[0].mxu0
        %v954 = vadd.f32 %v773, %v953
        %v955 = vpop.f32.mrb[0].mxu0
        %v956 = vpop.f32.mrb[0].mxu0
        %v957 = vadd.f32 %v773, %v956
        %v958 = vpop.f32.mrb[0].mxu0
        %959 = vmatprep.mubr.bf16.mxu0 0
        %960 = vmatmul.mubr.bf16.gmra.mrb[0].mxu0 %v749
        %v961 = vpop.f32.mrb[0].mxu0
        %v962 = vadd.f32 %v773, %v961
        %v963 = vpop.f32.mrb[0].mxu0
        %v964 = vpop.f32.mrb[0].mxu0
        %v965 = vadd.f32 %v773, %v964
        %v966 = vpop.f32.mrb[0].mxu0
        %967 = vmatprep.mubr.bf16.mxu0 0
        %968 = vmatmul.mubr.bf16.gmra.mrb[0].mxu0 %v750
        %v969 = vpop.f32.mrb[0].mxu0
        %v970 = vadd.f32 %v773, %v969
        %v971 = vpop.f32.mrb[0].mxu0
        %v972 = vpop.f32.mrb[0].mxu0
        %v973 = vadd.f32 %v773, %v972
        %v974 = vpop.f32.mrb[0].mxu0
        %975 = vmatprep.mubr.bf16.mxu0 0
        %976 = vmatmul.mubr.bf16.gmra.mrb[0].mxu0 %v751
        %v977 = vpop.f32.mrb[0].mxu0
        %v978 = vadd.f32 %v773, %v977
        %v979 = vpop.f32.mrb[0].mxu0
        %v980 = vpop.f32.mrb[0].mxu0
        %v981 = vadd.f32 %v773, %v980
        %v982 = vpop.f32.mrb[0].mxu0
        %983 = vdwg.mxu0
        %v984 = vmax.f32 %v858, 0.0
        %v985 = vmax.f32 %v861, 0.0
        %v986 = vmax.f32 %v866, 0.0
        %v987 = vmax.f32 %v869, 0.0
        %v988 = vmax.f32 %v874, 0.0
        %v989 = vmax.f32 %v877, 0.0
        %v990 = vmax.f32 %v882, 0.0
        %v991 = vmax.f32 %v885, 0.0
        %v992 = vmax.f32 %v890, 0.0
        %v993 = vmax.f32 %v893, 0.0
        %v994 = vmax.f32 %v898, 0.0
        %v995 = vmax.f32 %v901, 0.0
        %v996 = vmax.f32 %v906, 0.0
        %v997 = vmax.f32 %v909, 0.0
        %v998 = vmax.f32 %v914, 0.0
        %v999 = vmax.f32 %v917, 0.0
        %v1000 = vmax.f32 %v922, 0.0
        %v1001 = vmax.f32 %v925, 0.0
        %v1002 = vmax.f32 %v930, 0.0
        %v1003 = vmax.f32 %v933, 0.0
        %v1004 = vmax.f32 %v938, 0.0
        %v1005 = vmax.f32 %v941, 0.0
        %v1006 = vmax.f32 %v946, 0.0
        %v1007 = vmax.f32 %v949, 0.0
        %v1008 = vmax.f32 %v954, 0.0
        %v1009 = vmax.f32 %v957, 0.0
        %v1010 = vmax.f32 %v962, 0.0
        %v1011 = vmax.f32 %v965, 0.0
        %v1012 = vmax.f32 %v970, 0.0
        %v1013 = vmax.f32 %v973, 0.0
        %v1014 = vmax.f32 %v978, 0.0
        %v1015 = vmax.f32 %v981, 0.0
        %v1016 = vpack.c.bf16 %v985, %v984
        %v1017 = vpack.c.bf16 %v987, %v986
        %v1018 = vpack.c.bf16 %v989, %v988
        %v1019 = vpack.c.bf16 %v991, %v990
        %v1020 = vpack.c.bf16 %v993, %v992
        %v1021 = vpack.c.bf16 %v995, %v994
        %v1022 = vpack.c.bf16 %v997, %v996
        %v1023 = vpack.c.bf16 %v999, %v998
        %v1024 = vpack.c.bf16 %v1001, %v1000
        %v1025 = vpack.c.bf16 %v1003, %v1002
        %v1026 = vpack.c.bf16 %v1005, %v1004
        %v1027 = vpack.c.bf16 %v1007, %v1006
        %v1028 = vpack.c.bf16 %v1009, %v1008
        %v1029 = vpack.c.bf16 %v1011, %v1010
        %v1030 = vpack.c.bf16 %v1013, %v1012
        %v1031 = vpack.c.bf16 %v1015, %v1014
        %v1032 = vld [vmem:[#allocation8] sm:$0xf]
        %v1033 = vld [vmem:[#allocation8 + $0x4] sm:$0xf]
        %v1034 = vld [vmem:[#allocation8 + $0x8] sm:$0xf]
        %v1035 = vld [vmem:[#allocation8 + $0xc] sm:$0xf]
        %v1036 = vld [vmem:[#allocation8 + $0x10] sm:$0xf]
        %v1037 = vld [vmem:[#allocation8 + $0x14] sm:$0xf]
        %v1038 = vld [vmem:[#allocation8 + $0x18] sm:$0xf]
        %v1039 = vld [vmem:[#allocation8 + $0x1c] sm:$0xf]
        %v1040 = vld [vmem:[#allocation8 + $0x20] sm:$0xf]
        %v1041 = vld [vmem:[#allocation8 + $0x24] sm:$0xf]
        %v1042 = vld [vmem:[#allocation8 + $0x28] sm:$0xf]
        %v1043 = vld [vmem:[#allocation8 + $0x2c] sm:$0xf]
        %v1044 = vld [vmem:[#allocation8 + $0x30] sm:$0xf]
        %v1045 = vld [vmem:[#allocation8 + $0x34] sm:$0xf]
        %v1046 = vld [vmem:[#allocation8 + $0x38] sm:$0xf]
        %v1047 = vld [vmem:[#allocation8 + $0x3c] sm:$0xf]
        %v1048 = vld [vmem:[%s6] sm:$0x1]
        %v1050 = vlaneseq
        %v1051 = vshrl.u32 %v1050, 7
        %v1052 = vsub.s32 0, %v1051
        %v1053 = vrot.slane %v1048, %v1052
        %v1071 = vunpack.c.l.b16 %v1032
        %v1072 = vunpack.c.l.b16 %v1033
        %v1073 = vunpack.c.l.b16 %v1034
        %v1074 = vunpack.c.l.b16 %v1035
        %v1075 = vunpack.c.l.b16 %v1036
        %v1076 = vunpack.c.l.b16 %v1037
        %v1077 = vunpack.c.l.b16 %v1038
        %v1078 = vunpack.c.l.b16 %v1039
        %v1079 = vunpack.c.l.b16 %v1040
        %v1080 = vunpack.c.l.b16 %v1041
        %v1081 = vunpack.c.l.b16 %v1042
        %v1082 = vunpack.c.l.b16 %v1043
        %v1083 = vunpack.c.l.b16 %v1044
        %v1084 = vunpack.c.l.b16 %v1045
        %v1085 = vunpack.c.l.b16 %v1046
        %v1086 = vunpack.c.l.b16 %v1047
        %v1087 = vpack.c.b16 %v1072, %v1071
        %v1088 = vpack.c.b16 %v1074, %v1073
        %v1089 = vpack.c.b16 %v1076, %v1075
        %v1090 = vpack.c.b16 %v1078, %v1077
        %v1091 = vpack.c.b16 %v1080, %v1079
        %v1092 = vpack.c.b16 %v1082, %v1081
        %v1093 = vpack.c.b16 %v1084, %v1083
        %v1094 = vpack.c.b16 %v1086, %v1085
        %1103 = vmatprep.subr.bf16.mxu0 0
        %1104 = vmatpush1.bf16.msra.mxu0 %v1087
        %1105 = vmatprep.subr.bf16.mxu0 0
        %1106 = vmatpush1.bf16.msra.mxu0 %v1088
        %1107 = vmatprep.subr.bf16.mxu0 0
        %1108 = vmatpush1.bf16.msra.mxu0 %v1089
        %1109 = vmatprep.subr.bf16.mxu0 0
        %1110 = vmatpush1.bf16.msra.mxu0 %v1090
        %1111 = vmatprep.subr.bf16.mxu0 0
        %1112 = vmatpush1.bf16.msra.mxu0 %v1091
        %1113 = vmatprep.subr.bf16.mxu0 0
        %1114 = vmatpush1.bf16.msra.mxu0 %v1092
        %1115 = vmatprep.subr.bf16.mxu0 0
        %1116 = vmatpush1.bf16.msra.mxu0 %v1093
        %1117 = vmatprep.subr.bf16.mxu0 0
        %1118 = vmatpush1.bf16.msra.mxu0 %v1094
        %1119 = vmatprep.subr.bf16.mxu0 0
        %1120 = vmatpush1.bf16.msra.mxu0 0
        %1121 = vmatprep.subr.bf16.mxu0 0
        %1122 = vmatpush1.bf16.msra.mxu0 0
        %1123 = vmatprep.subr.bf16.mxu0 0
        %1124 = vmatpush1.bf16.msra.mxu0 0
        %1125 = vmatprep.subr.bf16.mxu0 0
        %1126 = vmatpush1.bf16.msra.mxu0 0
        %1127 = vmatprep.subr.bf16.mxu0 0
        %1128 = vmatpush1.bf16.msra.mxu0 0
        %1129 = vmatprep.subr.bf16.mxu0 0
        %1130 = vmatpush1.bf16.msra.mxu0 0
        %1131 = vmatprep.subr.bf16.mxu0 0
        %1132 = vmatpush1.bf16.msra.mxu0 0
        %1133 = vmatprep.subr.bf16.mxu0 0
        %1134 = vmatpush1.bf16.msra.mxu0 0
        %1135 = vmatprep.mubr.bf16.mxu0 0
        %1136 = vmatmul.mubr.bf16.gmra.mrb[0].mxu0 %v1016
        %v1137 = vpop.f32.mrb[0].mxu0
        %v1138 = vadd.f32 %v1053, %v1137
        %v1139 = vpop.f32.mrb[0].mxu0
        %v1140 = vpop.f32.mrb[0].mxu0
        %v1141 = vadd.f32 %v1053, %v1140
        %v1142 = vpop.f32.mrb[0].mxu0
        %1143 = vmatprep.mubr.bf16.mxu0 0
        %1144 = vmatmul.mubr.bf16.gmra.mrb[0].mxu0 %v1017
        %v1145 = vpop.f32.mrb[0].mxu0
        %v1146 = vadd.f32 %v1053, %v1145
        %v1147 = vpop.f32.mrb[0].mxu0
        %v1148 = vpop.f32.mrb[0].mxu0
        %v1149 = vadd.f32 %v1053, %v1148
        %v1150 = vpop.f32.mrb[0].mxu0
        %1151 = vmatprep.mubr.bf16.mxu0 0
        %1152 = vmatmul.mubr.bf16.gmra.mrb[0].mxu0 %v1018
        %v1153 = vpop.f32.mrb[0].mxu0
        %v1154 = vadd.f32 %v1053, %v1153
        %v1155 = vpop.f32.mrb[0].mxu0
        %v1156 = vpop.f32.mrb[0].mxu0
        %v1157 = vadd.f32 %v1053, %v1156
        %v1158 = vpop.f32.mrb[0].mxu0
        %1159 = vmatprep.mubr.bf16.mxu0 0
        %1160 = vmatmul.mubr.bf16.gmra.mrb[0].mxu0 %v1019
        %v1161 = vpop.f32.mrb[0].mxu0
        %v1162 = vadd.f32 %v1053, %v1161
        %v1163 = vpop.f32.mrb[0].mxu0
        %v1164 = vpop.f32.mrb[0].mxu0
        %v1165 = vadd.f32 %v1053, %v1164
        %v1166 = vpop.f32.mrb[0].mxu0
        %1167 = vmatprep.mubr.bf16.mxu0 0
        %1168 = vmatmul.mubr.bf16.gmra.mrb[0].mxu0 %v1020
        %v1169 = vpop.f32.mrb[0].mxu0
        %v1170 = vadd.f32 %v1053, %v1169
        %v1171 = vpop.f32.mrb[0].mxu0
        %v1172 = vpop.f32.mrb[0].mxu0
        %v1173 = vadd.f32 %v1053, %v1172
        %v1174 = vpop.f32.mrb[0].mxu0
        %1175 = vmatprep.mubr.bf16.mxu0 0
        %1176 = vmatmul.mubr.bf16.gmra.mrb[0].mxu0 %v1021
        %v1177 = vpop.f32.mrb[0].mxu0
        %v1178 = vadd.f32 %v1053, %v1177
        %v1179 = vpop.f32.mrb[0].mxu0
        %v1180 = vpop.f32.mrb[0].mxu0
        %v1181 = vadd.f32 %v1053, %v1180
        %v1182 = vpop.f32.mrb[0].mxu0
        %1183 = vmatprep.mubr.bf16.mxu0 0
        %1184 = vmatmul.mubr.bf16.gmra.mrb[0].mxu0 %v1022
        %v1185 = vpop.f32.mrb[0].mxu0
        %v1186 = vadd.f32 %v1053, %v1185
        %v1187 = vpop.f32.mrb[0].mxu0
        %v1188 = vpop.f32.mrb[0].mxu0
        %v1189 = vadd.f32 %v1053, %v1188
        %v1190 = vpop.f32.mrb[0].mxu0
        %1191 = vmatprep.mubr.bf16.mxu0 0
        %1192 = vmatmul.mubr.bf16.gmra.mrb[0].mxu0 %v1023
        %v1193 = vpop.f32.mrb[0].mxu0
        %v1194 = vadd.f32 %v1053, %v1193
        %v1195 = vpop.f32.mrb[0].mxu0
        %v1196 = vpop.f32.mrb[0].mxu0
        %v1197 = vadd.f32 %v1053, %v1196
        %v1198 = vpop.f32.mrb[0].mxu0
        %1199 = vmatprep.mubr.bf16.mxu0 0
        %1200 = vmatmul.mubr.bf16.gmra.mrb[0].mxu0 %v1024
        %v1201 = vpop.f32.mrb[0].mxu0
        %v1202 = vadd.f32 %v1053, %v1201
        %v1203 = vpop.f32.mrb[0].mxu0
        %v1204 = vpop.f32.mrb[0].mxu0
        %v1205 = vadd.f32 %v1053, %v1204
        %v1206 = vpop.f32.mrb[0].mxu0
        %1207 = vmatprep.mubr.bf16.mxu0 0
        %1208 = vmatmul.mubr.bf16.gmra.mrb[0].mxu0 %v1025
        %v1209 = vpop.f32.mrb[0].mxu0
        %v1210 = vadd.f32 %v1053, %v1209
        %v1211 = vpop.f32.mrb[0].mxu0
        %v1212 = vpop.f32.mrb[0].mxu0
        %v1213 = vadd.f32 %v1053, %v1212
        %v1214 = vpop.f32.mrb[0].mxu0
        %1215 = vmatprep.mubr.bf16.mxu0 0
        %1216 = vmatmul.mubr.bf16.gmra.mrb[0].mxu0 %v1026
        %v1217 = vpop.f32.mrb[0].mxu0
        %v1218 = vadd.f32 %v1053, %v1217
        %v1219 = vpop.f32.mrb[0].mxu0
        %v1220 = vpop.f32.mrb[0].mxu0
        %v1221 = vadd.f32 %v1053, %v1220
        %v1222 = vpop.f32.mrb[0].mxu0
        %1223 = vmatprep.mubr.bf16.mxu0 0
        %1224 = vmatmul.mubr.bf16.gmra.mrb[0].mxu0 %v1027
        %v1225 = vpop.f32.mrb[0].mxu0
        %v1226 = vadd.f32 %v1053, %v1225
        %v1227 = vpop.f32.mrb[0].mxu0
        %v1228 = vpop.f32.mrb[0].mxu0
        %v1229 = vadd.f32 %v1053, %v1228
        %v1230 = vpop.f32.mrb[0].mxu0
        %1231 = vmatprep.mubr.bf16.mxu0 0
        %1232 = vmatmul.mubr.bf16.gmra.mrb[0].mxu0 %v1028
        %v1233 = vpop.f32.mrb[0].mxu0
        %v1234 = vadd.f32 %v1053, %v1233
        %v1235 = vpop.f32.mrb[0].mxu0
        %v1236 = vpop.f32.mrb[0].mxu0
        %v1237 = vadd.f32 %v1053, %v1236
        %v1238 = vpop.f32.mrb[0].mxu0
        %1239 = vmatprep.mubr.bf16.mxu0 0
        %1240 = vmatmul.mubr.bf16.gmra.mrb[0].mxu0 %v1029
        %v1241 = vpop.f32.mrb[0].mxu0
        %v1242 = vadd.f32 %v1053, %v1241
        %v1243 = vpop.f32.mrb[0].mxu0
        %v1244 = vpop.f32.mrb[0].mxu0
        %v1245 = vadd.f32 %v1053, %v1244
        %v1246 = vpop.f32.mrb[0].mxu0
        %1247 = vmatprep.mubr.bf16.mxu0 0
        %1248 = vmatmul.mubr.bf16.gmra.mrb[0].mxu0 %v1030
        %v1249 = vpop.f32.mrb[0].mxu0
        %v1250 = vadd.f32 %v1053, %v1249
        %v1251 = vpop.f32.mrb[0].mxu0
        %v1252 = vpop.f32.mrb[0].mxu0
        %v1253 = vadd.f32 %v1053, %v1252
        %v1254 = vpop.f32.mrb[0].mxu0
        %1255 = vmatprep.mubr.bf16.mxu0 0
        %1256 = vmatmul.mubr.bf16.gmra.mrb[0].mxu0 %v1031
        %v1257 = vpop.f32.mrb[0].mxu0
        %v1258 = vadd.f32 %v1053, %v1257
        %v1259 = vpop.f32.mrb[0].mxu0
        %v1260 = vpop.f32.mrb[0].mxu0
        %v1261 = vadd.f32 %v1053, %v1260
        %v1262 = vpop.f32.mrb[0].mxu0
        %1263 = vdwg.mxu0
        %v1264 = vlaneseq
        %v1265 = vand.u32 %v1264, 127
        %vm1266 = vcmp.lt.s32.totalorder %v1265, 10
        %v1267 = vsel %vm1266, %v1138, -1e+30
        %v1268 = vsel %vm1266, %v1141, -1e+30
        %v1269 = vsel %vm1266, %v1146, -1e+30
        %v1270 = vsel %vm1266, %v1149, -1e+30
        %v1271 = vsel %vm1266, %v1154, -1e+30
        %v1272 = vsel %vm1266, %v1157, -1e+30
        %v1273 = vsel %vm1266, %v1162, -1e+30
        %v1274 = vsel %vm1266, %v1165, -1e+30
        %v1275 = vsel %vm1266, %v1170, -1e+30
        %v1276 = vsel %vm1266, %v1173, -1e+30
        %v1277 = vsel %vm1266, %v1178, -1e+30
        %v1278 = vsel %vm1266, %v1181, -1e+30
        %v1279 = vsel %vm1266, %v1186, -1e+30
        %v1280 = vsel %vm1266, %v1189, -1e+30
        %v1281 = vsel %vm1266, %v1194, -1e+30
        %v1282 = vsel %vm1266, %v1197, -1e+30
        %v1283 = vsel %vm1266, %v1202, -1e+30
        %v1284 = vsel %vm1266, %v1205, -1e+30
        %v1285 = vsel %vm1266, %v1210, -1e+30
        %v1286 = vsel %vm1266, %v1213, -1e+30
        %v1287 = vsel %vm1266, %v1218, -1e+30
        %v1288 = vsel %vm1266, %v1221, -1e+30
        %v1289 = vsel %vm1266, %v1226, -1e+30
        %v1290 = vsel %vm1266, %v1229, -1e+30
        %v1291 = vsel %vm1266, %v1234, -1e+30
        %v1292 = vsel %vm1266, %v1237, -1e+30
        %v1293 = vsel %vm1266, %v1242, -1e+30
        %v1294 = vsel %vm1266, %v1245, -1e+30
        %v1295 = vsel %vm1266, %v1250, -1e+30
        %v1296 = vsel %vm1266, %v1253, -1e+30
        %v1297 = vsel %vm1266, %v1258, -1e+30
        %v1298 = vsel %vm1266, %v1261, -1e+30
        %1299 = vmax.xlane.f32.xlu0 %v1267
        %v1300 = vpop.xlane.xlu0 %1299
        %1301 = vmax.xlane.f32.xlu0 %v1268
        %v1302 = vpop.xlane.xlu0 %1301
        %1303 = vmax.xlane.f32.xlu0 %v1269
        %v1304 = vpop.xlane.xlu0 %1303
        %1305 = vmax.xlane.f32.xlu0 %v1270
        %v1306 = vpop.xlane.xlu0 %1305
        %1307 = vmax.xlane.f32.xlu0 %v1271
        %v1308 = vpop.xlane.xlu0 %1307
        %1309 = vmax.xlane.f32.xlu0 %v1272
        %v1310 = vpop.xlane.xlu0 %1309
        %1311 = vmax.xlane.f32.xlu0 %v1273
        %v1312 = vpop.xlane.xlu0 %1311
        %1313 = vmax.xlane.f32.xlu0 %v1274
        %v1314 = vpop.xlane.xlu0 %1313
        %1315 = vmax.xlane.f32.xlu0 %v1275
        %v1316 = vpop.xlane.xlu0 %1315
        %1317 = vmax.xlane.f32.xlu0 %v1276
        %v1318 = vpop.xlane.xlu0 %1317
        %1319 = vmax.xlane.f32.xlu0 %v1277
        %v1320 = vpop.xlane.xlu0 %1319
        %1321 = vmax.xlane.f32.xlu0 %v1278
        %v1322 = vpop.xlane.xlu0 %1321
        %1323 = vmax.xlane.f32.xlu0 %v1279
        %v1324 = vpop.xlane.xlu0 %1323
        %1325 = vmax.xlane.f32.xlu0 %v1280
        %v1326 = vpop.xlane.xlu0 %1325
        %1327 = vmax.xlane.f32.xlu0 %v1281
        %v1328 = vpop.xlane.xlu0 %1327
        %1329 = vmax.xlane.f32.xlu0 %v1282
        %v1330 = vpop.xlane.xlu0 %1329
        %1331 = vmax.xlane.f32.xlu0 %v1283
        %v1332 = vpop.xlane.xlu0 %1331
        %1333 = vmax.xlane.f32.xlu0 %v1284
        %v1334 = vpop.xlane.xlu0 %1333
        %1335 = vmax.xlane.f32.xlu0 %v1285
        %v1336 = vpop.xlane.xlu0 %1335
        %1337 = vmax.xlane.f32.xlu0 %v1286
        %v1338 = vpop.xlane.xlu0 %1337
        %1339 = vmax.xlane.f32.xlu0 %v1287
        %v1340 = vpop.xlane.xlu0 %1339
        %1341 = vmax.xlane.f32.xlu0 %v1288
        %v1342 = vpop.xlane.xlu0 %1341
        %1343 = vmax.xlane.f32.xlu0 %v1289
        %v1344 = vpop.xlane.xlu0 %1343
        %1345 = vmax.xlane.f32.xlu0 %v1290
        %v1346 = vpop.xlane.xlu0 %1345
        %1347 = vmax.xlane.f32.xlu0 %v1291
        %v1348 = vpop.xlane.xlu0 %1347
        %1349 = vmax.xlane.f32.xlu0 %v1292
        %v1350 = vpop.xlane.xlu0 %1349
        %1351 = vmax.xlane.f32.xlu0 %v1293
        %v1352 = vpop.xlane.xlu0 %1351
        %1353 = vmax.xlane.f32.xlu0 %v1294
        %v1354 = vpop.xlane.xlu0 %1353
        %1355 = vmax.xlane.f32.xlu0 %v1295
        %v1356 = vpop.xlane.xlu0 %1355
        %1357 = vmax.xlane.f32.xlu0 %v1296
        %v1358 = vpop.xlane.xlu0 %1357
        %1359 = vmax.xlane.f32.xlu0 %v1297
        %v1360 = vpop.xlane.xlu0 %1359
        %1361 = vmax.xlane.f32.xlu0 %v1298
        %v1362 = vpop.xlane.xlu0 %1361
        %v1363 = vsub.f32 %v1267, %v1300
        %v1364 = vsub.f32 %v1268, %v1302
        %v1365 = vsub.f32 %v1269, %v1304
        %v1366 = vsub.f32 %v1270, %v1306
        %v1367 = vsub.f32 %v1271, %v1308
        %v1368 = vsub.f32 %v1272, %v1310
        %v1369 = vsub.f32 %v1273, %v1312
        %v1370 = vsub.f32 %v1274, %v1314
        %v1371 = vsub.f32 %v1275, %v1316
        %v1372 = vsub.f32 %v1276, %v1318
        %v1373 = vsub.f32 %v1277, %v1320
        %v1374 = vsub.f32 %v1278, %v1322
        %v1375 = vsub.f32 %v1279, %v1324
        %v1376 = vsub.f32 %v1280, %v1326
        %v1377 = vsub.f32 %v1281, %v1328
        %v1378 = vsub.f32 %v1282, %v1330
        %v1379 = vsub.f32 %v1283, %v1332
        %v1380 = vsub.f32 %v1284, %v1334
        %v1381 = vsub.f32 %v1285, %v1336
        %v1382 = vsub.f32 %v1286, %v1338
        %v1383 = vsub.f32 %v1287, %v1340
        %v1384 = vsub.f32 %v1288, %v1342
        %v1385 = vsub.f32 %v1289, %v1344
        %v1386 = vsub.f32 %v1290, %v1346
        %v1387 = vsub.f32 %v1291, %v1348
        %v1388 = vsub.f32 %v1292, %v1350
        %v1389 = vsub.f32 %v1293, %v1352
        %v1390 = vsub.f32 %v1294, %v1354
        %v1391 = vsub.f32 %v1295, %v1356
        %v1392 = vsub.f32 %v1296, %v1358
        %v1393 = vsub.f32 %v1297, %v1360
        %v1394 = vsub.f32 %v1298, %v1362
        %v1395 = vmul.f32 %v1363, 1.442695
        %v1396 = vpow.pop %v1395
        %v1397 = vmul.f32 %v1364, 1.442695
        %v1398 = vpow.pop %v1397
        %v1399 = vmul.f32 %v1365, 1.442695
        %v1400 = vpow.pop %v1399
        %v1401 = vmul.f32 %v1366, 1.442695
        %v1402 = vpow.pop %v1401
        %v1403 = vmul.f32 %v1367, 1.442695
        %v1404 = vpow.pop %v1403
        %v1405 = vmul.f32 %v1368, 1.442695
        %v1406 = vpow.pop %v1405
        %v1407 = vmul.f32 %v1369, 1.442695
        %v1408 = vpow.pop %v1407
        %v1409 = vmul.f32 %v1370, 1.442695
        %v1410 = vpow.pop %v1409
        %v1411 = vmul.f32 %v1371, 1.442695
        %v1412 = vpow.pop %v1411
        %v1413 = vmul.f32 %v1372, 1.442695
        %v1414 = vpow.pop %v1413
        %v1415 = vmul.f32 %v1373, 1.442695
        %v1416 = vpow.pop %v1415
        %v1417 = vmul.f32 %v1374, 1.442695
        %v1418 = vpow.pop %v1417
        %v1419 = vmul.f32 %v1375, 1.442695
        %v1420 = vpow.pop %v1419
        %v1421 = vmul.f32 %v1376, 1.442695
        %v1422 = vpow.pop %v1421
        %v1423 = vmul.f32 %v1377, 1.442695
        %v1424 = vpow.pop %v1423
        %v1425 = vmul.f32 %v1378, 1.442695
        %v1426 = vpow.pop %v1425
        %v1427 = vmul.f32 %v1379, 1.442695
        %v1428 = vpow.pop %v1427
        %v1429 = vmul.f32 %v1380, 1.442695
        %v1430 = vpow.pop %v1429
        %v1431 = vmul.f32 %v1381, 1.442695
        %v1432 = vpow.pop %v1431
        %v1433 = vmul.f32 %v1382, 1.442695
        %v1434 = vpow.pop %v1433
        %v1435 = vmul.f32 %v1383, 1.442695
        %v1436 = vpow.pop %v1435
        %v1437 = vmul.f32 %v1384, 1.442695
        %v1438 = vpow.pop %v1437
        %v1439 = vmul.f32 %v1385, 1.442695
        %v1440 = vpow.pop %v1439
        %v1441 = vmul.f32 %v1386, 1.442695
        %v1442 = vpow.pop %v1441
        %v1443 = vmul.f32 %v1387, 1.442695
        %v1444 = vpow.pop %v1443
        %v1445 = vmul.f32 %v1388, 1.442695
        %v1446 = vpow.pop %v1445
        %v1447 = vmul.f32 %v1389, 1.442695
        %v1448 = vpow.pop %v1447
        %v1449 = vmul.f32 %v1390, 1.442695
        %v1450 = vpow.pop %v1449
        %v1451 = vmul.f32 %v1391, 1.442695
        %v1452 = vpow.pop %v1451
        %v1453 = vmul.f32 %v1392, 1.442695
        %v1454 = vpow.pop %v1453
        %v1455 = vmul.f32 %v1393, 1.442695
        %v1456 = vpow.pop %v1455
        %v1457 = vmul.f32 %v1394, 1.442695
        %v1458 = vpow.pop %v1457
        %1459 = vadd.xlane.f32.xlu0 %v1396
        %v1460 = vpop.xlane.xlu0 %1459
        %1461 = vadd.xlane.f32.xlu0 %v1398
        %v1462 = vpop.xlane.xlu0 %1461
        %1463 = vadd.xlane.f32.xlu0 %v1400
        %v1464 = vpop.xlane.xlu0 %1463
        %1465 = vadd.xlane.f32.xlu0 %v1402
        %v1466 = vpop.xlane.xlu0 %1465
        %1467 = vadd.xlane.f32.xlu0 %v1404
        %v1468 = vpop.xlane.xlu0 %1467
        %1469 = vadd.xlane.f32.xlu0 %v1406
        %v1470 = vpop.xlane.xlu0 %1469
        %1471 = vadd.xlane.f32.xlu0 %v1408
        %v1472 = vpop.xlane.xlu0 %1471
        %1473 = vadd.xlane.f32.xlu0 %v1410
        %v1474 = vpop.xlane.xlu0 %1473
        %1475 = vadd.xlane.f32.xlu0 %v1412
        %v1476 = vpop.xlane.xlu0 %1475
        %1477 = vadd.xlane.f32.xlu0 %v1414
        %v1478 = vpop.xlane.xlu0 %1477
        %1479 = vadd.xlane.f32.xlu0 %v1416
        %v1480 = vpop.xlane.xlu0 %1479
        %1481 = vadd.xlane.f32.xlu0 %v1418
        %v1482 = vpop.xlane.xlu0 %1481
        %1483 = vadd.xlane.f32.xlu0 %v1420
        %v1484 = vpop.xlane.xlu0 %1483
        %1485 = vadd.xlane.f32.xlu0 %v1422
        %v1486 = vpop.xlane.xlu0 %1485
        %1487 = vadd.xlane.f32.xlu0 %v1424
        %v1488 = vpop.xlane.xlu0 %1487
        %1489 = vadd.xlane.f32.xlu0 %v1426
        %v1490 = vpop.xlane.xlu0 %1489
        %1491 = vadd.xlane.f32.xlu0 %v1428
        %v1492 = vpop.xlane.xlu0 %1491
        %1493 = vadd.xlane.f32.xlu0 %v1430
        %v1494 = vpop.xlane.xlu0 %1493
        %1495 = vadd.xlane.f32.xlu0 %v1432
        %v1496 = vpop.xlane.xlu0 %1495
        %1497 = vadd.xlane.f32.xlu0 %v1434
        %v1498 = vpop.xlane.xlu0 %1497
        %1499 = vadd.xlane.f32.xlu0 %v1436
        %v1500 = vpop.xlane.xlu0 %1499
        %1501 = vadd.xlane.f32.xlu0 %v1438
        %v1502 = vpop.xlane.xlu0 %1501
        %1503 = vadd.xlane.f32.xlu0 %v1440
        %v1504 = vpop.xlane.xlu0 %1503
        %1505 = vadd.xlane.f32.xlu0 %v1442
        %v1506 = vpop.xlane.xlu0 %1505
        %1507 = vadd.xlane.f32.xlu0 %v1444
        %v1508 = vpop.xlane.xlu0 %1507
        %1509 = vadd.xlane.f32.xlu0 %v1446
        %v1510 = vpop.xlane.xlu0 %1509
        %1511 = vadd.xlane.f32.xlu0 %v1448
        %v1512 = vpop.xlane.xlu0 %1511
        %1513 = vadd.xlane.f32.xlu0 %v1450
        %v1514 = vpop.xlane.xlu0 %1513
        %1515 = vadd.xlane.f32.xlu0 %v1452
        %v1516 = vpop.xlane.xlu0 %1515
        %1517 = vadd.xlane.f32.xlu0 %v1454
        %v1518 = vpop.xlane.xlu0 %1517
        %1519 = vadd.xlane.f32.xlu0 %v1456
        %v1520 = vpop.xlane.xlu0 %1519
        %1521 = vadd.xlane.f32.xlu0 %v1458
        %v1522 = vpop.xlane.xlu0 %1521
        %v1523 = vlog2.pop %v1460
        %v1524 = vmul.f32 %v1523, 0.6931472
        %v1525 = vlog2.pop %v1462
        %v1526 = vmul.f32 %v1525, 0.6931472
        %v1527 = vlog2.pop %v1464
        %v1528 = vmul.f32 %v1527, 0.6931472
        %v1529 = vlog2.pop %v1466
        %v1530 = vmul.f32 %v1529, 0.6931472
        %v1531 = vlog2.pop %v1468
        %v1532 = vmul.f32 %v1531, 0.6931472
        %v1533 = vlog2.pop %v1470
        %v1534 = vmul.f32 %v1533, 0.6931472
        %v1535 = vlog2.pop %v1472
        %v1536 = vmul.f32 %v1535, 0.6931472
        %v1537 = vlog2.pop %v1474
        %v1538 = vmul.f32 %v1537, 0.6931472
        %v1539 = vlog2.pop %v1476
        %v1540 = vmul.f32 %v1539, 0.6931472
        %v1541 = vlog2.pop %v1478
        %v1542 = vmul.f32 %v1541, 0.6931472
        %v1543 = vlog2.pop %v1480
        %v1544 = vmul.f32 %v1543, 0.6931472
        %v1545 = vlog2.pop %v1482
        %v1546 = vmul.f32 %v1545, 0.6931472
        %v1547 = vlog2.pop %v1484
        %v1548 = vmul.f32 %v1547, 0.6931472
        %v1549 = vlog2.pop %v1486
        %v1550 = vmul.f32 %v1549, 0.6931472
        %v1551 = vlog2.pop %v1488
        %v1552 = vmul.f32 %v1551, 0.6931472
        %v1553 = vlog2.pop %v1490
        %v1554 = vmul.f32 %v1553, 0.6931472
        %v1555 = vlog2.pop %v1492
        %v1556 = vmul.f32 %v1555, 0.6931472
        %v1557 = vlog2.pop %v1494
        %v1558 = vmul.f32 %v1557, 0.6931472
        %v1559 = vlog2.pop %v1496
        %v1560 = vmul.f32 %v1559, 0.6931472
        %v1561 = vlog2.pop %v1498
        %v1562 = vmul.f32 %v1561, 0.6931472
        %v1563 = vlog2.pop %v1500
        %v1564 = vmul.f32 %v1563, 0.6931472
        %v1565 = vlog2.pop %v1502
        %v1566 = vmul.f32 %v1565, 0.6931472
        %v1567 = vlog2.pop %v1504
        %v1568 = vmul.f32 %v1567, 0.6931472
        %v1569 = vlog2.pop %v1506
        %v1570 = vmul.f32 %v1569, 0.6931472
        %v1571 = vlog2.pop %v1508
        %v1572 = vmul.f32 %v1571, 0.6931472
        %v1573 = vlog2.pop %v1510
        %v1574 = vmul.f32 %v1573, 0.6931472
        %v1575 = vlog2.pop %v1512
        %v1576 = vmul.f32 %v1575, 0.6931472
        %v1577 = vlog2.pop %v1514
        %v1578 = vmul.f32 %v1577, 0.6931472
        %v1579 = vlog2.pop %v1516
        %v1580 = vmul.f32 %v1579, 0.6931472
        %v1581 = vlog2.pop %v1518
        %v1582 = vmul.f32 %v1581, 0.6931472
        %v1583 = vlog2.pop %v1520
        %v1584 = vmul.f32 %v1583, 0.6931472
        %v1585 = vlog2.pop %v1522
        %v1586 = vmul.f32 %v1585, 0.6931472
        %v1587 = vadd.f32 %v1300, %v1524
        %v1588 = vadd.f32 %v1302, %v1526
        %v1589 = vadd.f32 %v1304, %v1528
        %v1590 = vadd.f32 %v1306, %v1530
        %v1591 = vadd.f32 %v1308, %v1532
        %v1592 = vadd.f32 %v1310, %v1534
        %v1593 = vadd.f32 %v1312, %v1536
        %v1594 = vadd.f32 %v1314, %v1538
        %v1595 = vadd.f32 %v1316, %v1540
        %v1596 = vadd.f32 %v1318, %v1542
        %v1597 = vadd.f32 %v1320, %v1544
        %v1598 = vadd.f32 %v1322, %v1546
        %v1599 = vadd.f32 %v1324, %v1548
        %v1600 = vadd.f32 %v1326, %v1550
        %v1601 = vadd.f32 %v1328, %v1552
        %v1602 = vadd.f32 %v1330, %v1554
        %v1603 = vadd.f32 %v1332, %v1556
        %v1604 = vadd.f32 %v1334, %v1558
        %v1605 = vadd.f32 %v1336, %v1560
        %v1606 = vadd.f32 %v1338, %v1562
        %v1607 = vadd.f32 %v1340, %v1564
        %v1608 = vadd.f32 %v1342, %v1566
        %v1609 = vadd.f32 %v1344, %v1568
        %v1610 = vadd.f32 %v1346, %v1570
        %v1611 = vadd.f32 %v1348, %v1572
        %v1612 = vadd.f32 %v1350, %v1574
        %v1613 = vadd.f32 %v1352, %v1576
        %v1614 = vadd.f32 %v1354, %v1578
        %v1615 = vadd.f32 %v1356, %v1580
        %v1616 = vadd.f32 %v1358, %v1582
        %v1617 = vadd.f32 %v1360, %v1584
        %v1618 = vadd.f32 %v1362, %v1586
        %v1619 = vsub.f32 %v1267, %v1587
        %v1620 = vsub.f32 %v1268, %v1588
        %v1621 = vsub.f32 %v1269, %v1589
        %v1622 = vsub.f32 %v1270, %v1590
        %v1623 = vsub.f32 %v1271, %v1591
        %v1624 = vsub.f32 %v1272, %v1592
        %v1625 = vsub.f32 %v1273, %v1593
        %v1626 = vsub.f32 %v1274, %v1594
        %v1627 = vsub.f32 %v1275, %v1595
        %v1628 = vsub.f32 %v1276, %v1596
        %v1629 = vsub.f32 %v1277, %v1597
        %v1630 = vsub.f32 %v1278, %v1598
        %v1631 = vsub.f32 %v1279, %v1599
        %v1632 = vsub.f32 %v1280, %v1600
        %v1633 = vsub.f32 %v1281, %v1601
        %v1634 = vsub.f32 %v1282, %v1602
        %v1635 = vsub.f32 %v1283, %v1603
        %v1636 = vsub.f32 %v1284, %v1604
        %v1637 = vsub.f32 %v1285, %v1605
        %v1638 = vsub.f32 %v1286, %v1606
        %v1639 = vsub.f32 %v1287, %v1607
        %v1640 = vsub.f32 %v1288, %v1608
        %v1641 = vsub.f32 %v1289, %v1609
        %v1642 = vsub.f32 %v1290, %v1610
        %v1643 = vsub.f32 %v1291, %v1611
        %v1644 = vsub.f32 %v1292, %v1612
        %v1645 = vsub.f32 %v1293, %v1613
        %v1646 = vsub.f32 %v1294, %v1614
        %v1647 = vsub.f32 %v1295, %v1615
        %v1648 = vsub.f32 %v1296, %v1616
        %v1649 = vsub.f32 %v1297, %v1617
        %v1650 = vsub.f32 %v1298, %v1618
        %1651 = vst [vmem:[%s340] sm:$0xff] %v1619
        %1652 = vst [vmem:[%s340 + $0x8] sm:$0xff] %v1620
        %1653 = vst [vmem:[%s340 + $0x10] sm:$0xff] %v1621
        %1654 = vst [vmem:[%s340 + $0x18] sm:$0xff] %v1622
        %1655 = vst [vmem:[%s340 + $0x20] sm:$0xff] %v1623
        %1656 = vst [vmem:[%s340 + $0x28] sm:$0xff] %v1624
        %1657 = vst [vmem:[%s340 + $0x30] sm:$0xff] %v1625
        %1658 = vst [vmem:[%s340 + $0x38] sm:$0xff] %v1626
        %1659 = vst [vmem:[%s340 + $0x40] sm:$0xff] %v1627
        %1660 = vst [vmem:[%s340 + $0x48] sm:$0xff] %v1628
        %1661 = vst [vmem:[%s340 + $0x50] sm:$0xff] %v1629
        %1662 = vst [vmem:[%s340 + $0x58] sm:$0xff] %v1630
        %1663 = vst [vmem:[%s340 + $0x60] sm:$0xff] %v1631
        %1664 = vst [vmem:[%s340 + $0x68] sm:$0xff] %v1632
        %1665 = vst [vmem:[%s340 + $0x70] sm:$0xff] %v1633
        %1666 = vst [vmem:[%s340 + $0x78] sm:$0xff] %v1634
        %1667 = vst [vmem:[%s340 + $0x80] sm:$0xff] %v1635
        %1668 = vst [vmem:[%s340 + $0x88] sm:$0xff] %v1636
        %1669 = vst [vmem:[%s340 + $0x90] sm:$0xff] %v1637
        %1670 = vst [vmem:[%s340 + $0x98] sm:$0xff] %v1638
        %1671 = vst [vmem:[%s340 + $0xa0] sm:$0xff] %v1639
        %1672 = vst [vmem:[%s340 + $0xa8] sm:$0xff] %v1640
        %1673 = vst [vmem:[%s340 + $0xb0] sm:$0xff] %v1641
        %1674 = vst [vmem:[%s340 + $0xb8] sm:$0xff] %v1642
        %1675 = vst [vmem:[%s340 + $0xc0] sm:$0xff] %v1643
        %1676 = vst [vmem:[%s340 + $0xc8] sm:$0xff] %v1644
        %1677 = vst [vmem:[%s340 + $0xd0] sm:$0xff] %v1645
        %1678 = vst [vmem:[%s340 + $0xd8] sm:$0xff] %v1646
        %1679 = vst [vmem:[%s340 + $0xe0] sm:$0xff] %v1647
        %1680 = vst [vmem:[%s340 + $0xe8] sm:$0xff] %v1648
        %1681 = vst [vmem:[%s340 + $0xf0] sm:$0xff] %v1649
        %1682 = vst [vmem:[%s340 + $0xf8] sm:$0xff] %v1650
        %s1683 = sand.u32 %s186, 1
        %s1684 = scalar_lea.sflag [#allocation4], %s1683
        %s1685 = sand.u32 %s186, 1
        %s1686 = smul.addr %s1685, 256
        %s1687 = scalar_lea.vmem [#allocation10], %s1686
        // Predicated region
        $region65: #{tpu_custom_call.1} parent=47 // pred_check
          %p1688 = pneg %p196
        $region66: #{tpu_custom_call.1} parent=47 // pred_check_branch
          %1690 = sbr.rel (%p1688) target = $region68
        $region67: #{tpu_custom_call.1} parent=47 // pred_region
          %s1691 = smul.u32 32, %s26
          %s1693 = ssub.s32 4096, 4096
          %1694 = vsyncadd %s1684, %s1693
          %s1695 = smul.addr %s1691, 128
          %s1696 = scalar_lea.hbm %s7, %s1695
          %s1697 = sshll.u32 %s1687, 4
          %s1698 = int_to_ptr.vmem [resolvable:$true] %s1697
          %1703 = dma.vmem_to_hbm [thread:$0]  %s1698, 4096, %s1696, %s1684, 128, 128, 8
        $region68: #{tpu_custom_call.1} parent=47 // pred_fallthru
          _
      $region48: #{tpu_custom_call.1} parent=5 // pred_fallthru
        _
      %p1704 = scmp.le.s32.totalorder 2, %s21
      // Predicated region
      $region69: #{tpu_custom_call.1} parent=5 // pred_check
        %p1705 = pneg %p1704
      $region70: #{tpu_custom_call.1} parent=5 // pred_check_branch
        %1707 = sbr.rel (%p1705) target = $region72
      $region71: #{tpu_custom_call.1} parent=5 // pred_region
        %s1708 = ssub.s32 %s21, 2
        // Predicated region
        $region73: #{tpu_custom_call.1} parent=71 // pred_check
          %p1709 = pneg %p202
        $region74: #{tpu_custom_call.1} parent=71 // pred_check_branch
          %1711 = sbr.rel (%p1709) target = $region76
        $region75: #{tpu_custom_call.1} parent=71 // pred_region
          %s1712 = sand.u32 %s187, 1
          %s1713 = scalar_lea.sflag [#allocation4], %s1712
          %s1714 = sand.u32 %s187, 1
          %s1715 = smul.addr %s1714, 256
          %s1716 = scalar_lea.vmem [#allocation10], %s1715
          %1717 = dma.done %s1713, 4096
        $region76: #{tpu_custom_call.1} parent=71 // pred_fallthru
          _
      $region72: #{tpu_custom_call.1} parent=5 // pred_fallthru
        _
    $region6: #{tpu_custom_call.1} parent=1 // loop_footer
      %s25 = sadd.s32 1, %s21
    $region7: #{tpu_custom_call.1} parent=1 // loop_footer_branch
      %20 = sbr.rel target = $region3
    $region8: #{tpu_custom_call.1} parent=1 // loop_exit
      _
    %1718 = vsyncpa [#allocation3], 1
    %s1719 = scalar_lea.sflag [#allocation3], 1
    %1720 = vsyncpa %s1719, 1
    %1721 = vsyncpa [#allocation6], 1
    %1722 = vsyncpa [#allocation9], 1
    %1723 = vsyncpa [#allocation4], 1
    %s1724 = scalar_lea.sflag [#allocation4], 1
    %1725 = vsyncpa %s1724, 1

</llo_original>
